<compile_context>
chip_gen: v7x
topology: tpu7x:2x2x1
jax: 0.10.0
libtpu: 0.0.40
codegen_flags: <defaults>
</compile_context>

<pallas_src>
import functools

import jax
import jax.numpy as jnp
import numpy as np
from jax import lax
from jax.experimental import pallas as pl
from jax.experimental.pallas import tpu as pltpu


def _mha_kernel(x_ref, wq_ref, bq_ref, wkv_ref, bkv_ref, wp_ref, bp_ref,
                out_ref, attn_ref, k_scr, v_scr, o_scr, *,
                num_heads, head_dim, q_tile, scale, compute_dtype):
    """One grid step == one (batch element, query tile).

    x_ref    : (1, M, C)   full-sequence tokens (DMA'd once per batch element)
    wq_ref   : (C, C)      W_q^T   (compute dtype)   bq_ref : (1, C)  f32
    wkv_ref  : (C, 2C)     W_kv^T  (compute dtype)   bkv_ref: (1, 2C) f32
    wp_ref   : (C, C)      W_proj^T (compute dtype)  bp_ref : (1, C)  f32
    out_ref  : (1, TQ, C)      projected output tile
    attn_ref : (1, H, TQ, M)   softmaxed attention (head-major layout)
    k_scr    : (M, C) compute_dtype   v_scr : (M, C) compute_dtype
    o_scr    : (TQ, C) f32  per-head output accumulator
    """
    c = num_heads * head_dim
    qi = pl.program_id(1)

    # K/V projection once per batch element; reused across query tiles.
    @pl.when(qi == 0)
    def _():
        xkv = x_ref[0].astype(compute_dtype)                          # (M, C)
        kv = jnp.dot(xkv, wkv_ref[...],
                     preferred_element_type=jnp.float32) + bkv_ref[...]
        k_scr[...] = kv[:, :c].astype(compute_dtype)
        v_scr[...] = kv[:, c:].astype(compute_dtype)

    # Query tile = sublane slice of the resident x block (no extra DMA).
    q_start = pl.multiple_of(qi * q_tile, q_tile)
    xq = x_ref[0, pl.ds(q_start, q_tile), :].astype(compute_dtype)    # (TQ, C)
    # Q projection; fold the softmax scale into q once.
    q = (jnp.dot(xq, wq_ref[...],
                 preferred_element_type=jnp.float32) + bq_ref[...]) * scale
    q = q.astype(compute_dtype)

    dn = (((1,), (1,)), ((), ()))       # contract last dims, no transpose
    for h in range(num_heads):
        lo = h * head_dim
        hi = lo + head_dim
        qh = q[:, lo:hi]                                              # (TQ, D)
        kh = k_scr[:, lo:hi]                                          # (M, D)
        vh = v_scr[:, lo:hi]                                          # (M, D)

        s = lax.dot_general(qh, kh, dn,
                            preferred_element_type=jnp.float32)       # (TQ, M)
        s = s - jnp.max(s, axis=-1, keepdims=True)
        e = jnp.exp(s)
        p = e * pl.reciprocal(jnp.sum(e, axis=-1, keepdims=True), approx=True)

        # Store this head's probabilities directly (no stack, no H live tiles).
        attn_ref[0, h] = p.astype(attn_ref.dtype)
        # Accumulate this head's output into its lane slice of the scratch.
        o_scr[:, lo:hi] = jnp.dot(p.astype(compute_dtype), vh,
                                  preferred_element_type=jnp.float32)

    # Single (TQ, C) x (C, C) output projection.
    out_ref[0] = (jnp.dot(o_scr[...].astype(compute_dtype), wp_ref[...],
                          preferred_element_type=jnp.float32)
                  + bp_ref[...]).astype(out_ref.dtype)


def multi_head_attention(x, params, num_heads, *, q_tile=None,
                         compute_dtype=jnp.bfloat16, attn_layout="bnmh"):
    """x: (B, N, C) float32.  Returns (out (B,N,C), attention).

    attn_layout: "bnmh" (torch semantics, default) or "bhnm" (kernel-native,
    skips the pure-layout transpose in the wrapper).
    """
    B, N, C = x.shape
    M = N                                    # self-attention (y = x)
    head_dim = C // num_heads
    scale = head_dim ** (-0.5)

    if q_tile is None:
        # Largest query tile whose (H, TQ, M) f32 attention block stays under a
        # per-buffer budget that fits v7x's 64 MiB VMEM with double buffering.
        q_tile = N
        budget = 12 * 1024 * 1024
        while (q_tile > 8 and q_tile % 16 == 0
               and num_heads * q_tile * M * 4 > budget):
            q_tile //= 2
    assert N % q_tile == 0, "sequence length must be divisible by q_tile"

    wq_t, bq, wkv_t, bkv, wp_t, bp = params   # transposed weights, row-biases
    # Weights hit the MXU in compute_dtype anyway; cast once in the wrapper.
    wq_c = wq_t.astype(compute_dtype)
    wkv_c = wkv_t.astype(compute_dtype)
    wp_c = wp_t.astype(compute_dtype)

    kernel = functools.partial(_mha_kernel, num_heads=num_heads,
                               head_dim=head_dim, q_tile=q_tile, scale=scale,
                               compute_dtype=compute_dtype)

    grid = (B, N // q_tile)
    grid_spec = pltpu.PrefetchScalarGridSpec(
        num_scalar_prefetch=0,
        grid=grid,
        in_specs=[
            pl.BlockSpec((1, M, C), lambda b, qi: (b, 0, 0)),     # x (full seq)
            pl.BlockSpec((C, C), lambda b, qi: (0, 0)),           # W_q^T
            pl.BlockSpec((1, C), lambda b, qi: (0, 0)),           # b_q
            pl.BlockSpec((C, 2 * C), lambda b, qi: (0, 0)),       # W_kv^T
            pl.BlockSpec((1, 2 * C), lambda b, qi: (0, 0)),       # b_kv
            pl.BlockSpec((C, C), lambda b, qi: (0, 0)),           # W_p^T
            pl.BlockSpec((1, C), lambda b, qi: (0, 0)),           # b_p
        ],
        out_specs=[
            pl.BlockSpec((1, q_tile, C), lambda b, qi: (b, qi, 0)),
            pl.BlockSpec((1, num_heads, q_tile, M), lambda b, qi: (b, 0, qi, 0)),
        ],
        scratch_shapes=[
            pltpu.VMEM((M, C), compute_dtype),      # K
            pltpu.VMEM((M, C), compute_dtype),      # V
            pltpu.VMEM((q_tile, C), jnp.float32),   # per-head output accum
        ],
    )

    out, attn_hnm = pl.pallas_call(
        kernel,
        out_shape=(
            jax.ShapeDtypeStruct((B, N, C), jnp.float32),
            jax.ShapeDtypeStruct((B, num_heads, N, M), jnp.float32),
        ),
        grid_spec=grid_spec,
        compiler_params=pltpu.CompilerParams(
            dimension_semantics=("parallel", "arbitrary"),
            vmem_limit_bytes=64 * 1024 * 1024,
        ),
    )(x, wq_c, bq, wkv_c, bkv, wp_c, bp)

    if attn_layout == "bhnm":
        return out, attn_hnm
    # Pure layout transform to match torch's 'bnmh' attention layout.
    return out, jnp.transpose(attn_hnm, (0, 2, 3, 1))


def make_params(key, dim_self, dim_ref):
    """Deterministic synthetic weights matching the nn.Linear shapes."""
    k1, k2, k3, k4, k5, k6 = jax.random.split(key, 6)
    # torch stores Linear weight as (out_features, in_features); we pass W^T.
    wq = jax.random.normal(k1, (dim_self, dim_self), jnp.float32) * 0.05
    bq = jax.random.normal(k2, (dim_self,), jnp.float32) * 0.05
    wkv = jax.random.normal(k3, (2 * dim_self, dim_ref), jnp.float32) * 0.05
    bkv = jax.random.normal(k4, (2 * dim_self,), jnp.float32) * 0.05
    wp = jax.random.normal(k5, (dim_self, dim_self), jnp.float32) * 0.05
    bp = jax.random.normal(k6, (dim_self,), jnp.float32) * 0.05
    return (wq.T, bq[None, :], wkv.T, bkv[None, :], wp.T, bp[None, :])


def reference_forward(x, params, num_heads):
    """Pure-JAX f32 replica of the PyTorch forward (for validation)."""
    wq_t, bq, wkv_t, bkv, wp_t, bp = params
    b, n, c = x.shape
    m = n
    d = c // num_heads
    scale = d ** (-0.5)
    q = (x @ wq_t + bq).reshape(b, n, num_heads, d)
    kv = (x @ wkv_t + bkv).reshape(b, m, 2, num_heads, d)
    keys, values = kv[:, :, 0], kv[:, :, 1]
    attn = jnp.einsum('bnhd,bmhd->bnmh', q, keys) * scale
    attn = jax.nn.softmax(attn, axis=2)
    out = jnp.einsum('bnmh,bmhd->bnhd', attn, values).reshape(b, n, c)
    out = out @ wp_t + bp
    return out, attn


if __name__ == "__main__":
    # TODO(synk): optional `mask` argument of the PyTorch forward is not wired
    # into the kernel (mask=None path only); dropout is a no-op in eval.
    B, N = 2, 8
    dim_self = 32
    dim_ref = dim_self          # self-attention: y = x, so dim_ref == dim_self
    num_heads = 4

    key = jax.random.PRNGKey(0)
    kx, kp = jax.random.split(key)
    x = jax.random.normal(kx, (B, N, dim_self), jnp.float32)
    params = make_params(kp, dim_self, dim_ref)

    out, attn = multi_head_attention(x, params, num_heads)
    out = jax.block_until_ready(out)
    attn = jax.block_until_ready(attn)

    out_ref, attn_ref = reference_forward(x, params, num_heads)
    # bf16 MXU operands + approx-reciprocal softmax => loosened tolerances.
    np.testing.assert_allclose(np.asarray(out), np.asarray(out_ref),
                               rtol=2e-2, atol=2e-2)
    np.testing.assert_allclose(np.asarray(attn), np.asarray(attn_ref),
                               rtol=2e-2, atol=2e-2)

    print("KERNEL_OK")
</pallas_src>

<mosaic_0001>
module attributes {stable_mosaic.version = 11 : i64} {
  func.func @_mha_kernel(%arg0: i32, %arg1: i32, %arg2: memref<1x8x32xf32, #tpu.memory_space<vmem>>, %arg3: memref<32x32xbf16, #tpu.memory_space<vmem>>, %arg4: memref<1x32xf32, #tpu.memory_space<vmem>>, %arg5: memref<32x64xbf16, #tpu.memory_space<vmem>>, %arg6: memref<1x64xf32, #tpu.memory_space<vmem>>, %arg7: memref<32x32xbf16, #tpu.memory_space<vmem>>, %arg8: memref<1x32xf32, #tpu.memory_space<vmem>>, %arg9: memref<1x8x32xf32, #tpu.memory_space<vmem>>, %arg10: memref<1x4x8x8xf32, #tpu.memory_space<vmem>>, %arg11: memref<8x32xbf16, #tpu.memory_space<vmem>>, %arg12: memref<8x32xbf16, #tpu.memory_space<vmem>>, %arg13: memref<8x32xf32, #tpu.memory_space<vmem>>) attributes {dimension_semantics = [#tpu.dimension_semantics<parallel>, #tpu.dimension_semantics<arbitrary>], iteration_bounds = array<i64: 2, 1>, scalar_prefetch = 0 : i64, scratch_operands = 3 : i64, tpu.core_type = #tpu.core_type<tc>, window_params = [{transform_indices = @transform_0, window_bounds = array<i64: 1, 8, 32>}, {pipeline_mode = #tpu.pipeline_mode<synchronous>, transform_indices = @transform_1, window_bounds = array<i64: 32, 32>}, {pipeline_mode = #tpu.pipeline_mode<synchronous>, transform_indices = @transform_2, window_bounds = array<i64: 1, 32>}, {pipeline_mode = #tpu.pipeline_mode<synchronous>, transform_indices = @transform_3, window_bounds = array<i64: 32, 64>}, {pipeline_mode = #tpu.pipeline_mode<synchronous>, transform_indices = @transform_4, window_bounds = array<i64: 1, 64>}, {pipeline_mode = #tpu.pipeline_mode<synchronous>, transform_indices = @transform_5, window_bounds = array<i64: 32, 32>}, {pipeline_mode = #tpu.pipeline_mode<synchronous>, transform_indices = @transform_6, window_bounds = array<i64: 1, 32>}, {transform_indices = @transform_7, window_bounds = array<i64: 1, 8, 32>}, {transform_indices = @transform_8, window_bounds = array<i64: 1, 4, 8, 8>}]} {
    %c0_i32 = arith.constant 0 : i32
    %0 = arith.cmpi eq, %arg1, %c0_i32 : i32
    %1 = arith.extui %0 : i1 to i32
    %c0_i32_0 = arith.constant 0 : i32
    %2 = arith.cmpi ne, %1, %c0_i32_0 : i32
    scf.if %2 {
      %c0_67 = arith.constant 0 : index
      %c0_68 = arith.constant 0 : index
      %c0_69 = arith.constant 0 : index
      %107 = vector.load %arg2[%c0_67, %c0_68, %c0_69] : memref<1x8x32xf32, #tpu.memory_space<vmem>>, vector<1x8x32xf32>
      %108 = vector.shape_cast %107 : vector<1x8x32xf32> to vector<8x32xf32>
      %109 = arith.truncf %108 : vector<8x32xf32> to vector<8x32xbf16>
      %c0_70 = arith.constant 0 : index
      %c0_71 = arith.constant 0 : index
      %110 = vector.load %arg5[%c0_70, %c0_71] : memref<32x64xbf16, #tpu.memory_space<vmem>>, vector<32x64xbf16>
      %cst_72 = arith.constant dense<0.000000e+00> : vector<8x64xf32>
      %111 = tpu.matmul %109, %110, %cst_72 {dimension_numbers = #tpu.dot_dimension_numbers<[1], [0], [0], [1], [0, 0, 1, 1], [], []>} : vector<8x32xbf16>, vector<32x64xbf16>, vector<8x64xf32> -> vector<8x64xf32>
      %c0_73 = arith.constant 0 : index
      %c0_74 = arith.constant 0 : index
      %112 = vector.load %arg6[%c0_73, %c0_74] : memref<1x64xf32, #tpu.memory_space<vmem>>, vector<1x64xf32>
      %113 = vector.broadcast %112 : vector<1x64xf32> to vector<8x64xf32>
      %114 = arith.addf %111, %113 : vector<8x64xf32>
      %115 = vector.extract_strided_slice %114 {offsets = [0, 0], sizes = [8, 32], strides = [1, 1]} : vector<8x64xf32> to vector<8x32xf32>
      %116 = arith.truncf %115 : vector<8x32xf32> to vector<8x32xbf16>
      %c0_75 = arith.constant 0 : index
      %c0_76 = arith.constant 0 : index
      %117 = vector.load %arg11[%c0_75, %c0_76] : memref<8x32xbf16, #tpu.memory_space<vmem>>, vector<8x32xbf16>
      tpu.vector_store %arg11[%c0_75, %c0_76], %116 {strides = array<i32>} : memref<8x32xbf16, #tpu.memory_space<vmem>>, vector<8x32xbf16>,
      %118 = vector.extract_strided_slice %114 {offsets = [0, 32], sizes = [8, 32], strides = [1, 1]} : vector<8x64xf32> to vector<8x32xf32>
      %119 = arith.truncf %118 : vector<8x32xf32> to vector<8x32xbf16>
      %c0_77 = arith.constant 0 : index
      %c0_78 = arith.constant 0 : index
      %120 = vector.load %arg12[%c0_77, %c0_78] : memref<8x32xbf16, #tpu.memory_space<vmem>>, vector<8x32xbf16>
      tpu.vector_store %arg12[%c0_77, %c0_78], %119 {strides = array<i32>} : memref<8x32xbf16, #tpu.memory_space<vmem>>, vector<8x32xbf16>,
    } else {
    }
    %c8_i32 = arith.constant 8 : i32
    %3 = arith.muli %arg1, %c8_i32 : i32
    %4 = tpu.assume_multiple %3, 8 : i32
    %c0 = arith.constant 0 : index
    %5 = arith.index_cast %4 : i32 to index
    %c0_1 = arith.constant 0 : index
    %6 = vector.load %arg2[%c0, %5, %c0_1] : memref<1x8x32xf32, #tpu.memory_space<vmem>>, vector<1x8x32xf32>
    %7 = vector.shape_cast %6 : vector<1x8x32xf32> to vector<8x32xf32>
    %8 = arith.truncf %7 : vector<8x32xf32> to vector<8x32xbf16>
    %c0_2 = arith.constant 0 : index
    %c0_3 = arith.constant 0 : index
    %9 = vector.load %arg3[%c0_2, %c0_3] : memref<32x32xbf16, #tpu.memory_space<vmem>>, vector<32x32xbf16>
    %cst = arith.constant dense<0.000000e+00> : vector<8x32xf32>
    %10 = tpu.matmul %8, %9, %cst {dimension_numbers = #tpu.dot_dimension_numbers<[1], [0], [0], [1], [0, 0, 1, 1], [], []>} : vector<8x32xbf16>, vector<32x32xbf16>, vector<8x32xf32> -> vector<8x32xf32>
    %c0_4 = arith.constant 0 : index
    %c0_5 = arith.constant 0 : index
    %11 = vector.load %arg4[%c0_4, %c0_5] : memref<1x32xf32, #tpu.memory_space<vmem>>, vector<1x32xf32>
    %12 = vector.broadcast %11 : vector<1x32xf32> to vector<8x32xf32>
    %13 = arith.addf %10, %12 : vector<8x32xf32>
    %cst_6 = arith.constant 0.353553385 : f32
    %14 = vector.broadcast %cst_6 : f32 to vector<8x32xf32>
    %15 = arith.mulf %13, %14 : vector<8x32xf32>
    %16 = arith.truncf %15 : vector<8x32xf32> to vector<8x32xbf16>
    %17 = vector.extract_strided_slice %16 {offsets = [0, 0], sizes = [8, 8], strides = [1, 1]} : vector<8x32xbf16> to vector<8x8xbf16>
    %c0_7 = arith.constant 0 : index
    %c0_8 = arith.constant 0 : index
    %18 = vector.load %arg11[%c0_7, %c0_8] : memref<8x32xbf16, #tpu.memory_space<vmem>>, vector<8x8xbf16>
    %c0_9 = arith.constant 0 : index
    %c0_10 = arith.constant 0 : index
    %19 = vector.load %arg12[%c0_9, %c0_10] : memref<8x32xbf16, #tpu.memory_space<vmem>>, vector<8x8xbf16>
    %cst_11 = arith.constant dense<0.000000e+00> : vector<8x8xf32>
    %20 = tpu.matmul %17, %18, %cst_11 {dimension_numbers = #tpu.dot_dimension_numbers<[1], [1], [0], [0], [0, 0, 1, 0], [], []>} : vector<8x8xbf16>, vector<8x8xbf16>, vector<8x8xf32> -> vector<8x8xf32>
    %cst_12 = arith.constant dense<0xFF800000> : vector<8xf32>
    %21 = vector.multi_reduction <maximumf>, %20, %cst_12 [1] : vector<8x8xf32> to vector<8xf32>
    %22 = vector.shape_cast %21 : vector<8xf32> to vector<8x1xf32>
    %23 = vector.broadcast %22 : vector<8x1xf32> to vector<8x8xf32>
    %24 = arith.subf %20, %23 : vector<8x8xf32>
    %25 = math.exp %24 : vector<8x8xf32>
    %cst_13 = arith.constant dense<0.000000e+00> : vector<8xf32>
    %26 = vector.multi_reduction <add>, %25, %cst_13 [1] : vector<8x8xf32> to vector<8xf32>
    %27 = vector.shape_cast %26 : vector<8xf32> to vector<8x1xf32>
    %28 = tpu.reciprocal %27 {approx = true} : vector<8x1xf32> -> vector<8x1xf32>
    %29 = vector.broadcast %28 : vector<8x1xf32> to vector<8x8xf32>
    %30 = arith.mulf %25, %29 : vector<8x8xf32>
    %c0_14 = arith.constant 0 : index
    %c0_15 = arith.constant 0 : index
    %c0_16 = arith.constant 0 : index
    %c0_17 = arith.constant 0 : index
    %31 = vector.load %arg10[%c0_14, %c0_15, %c0_16, %c0_17] : memref<1x4x8x8xf32, #tpu.memory_space<vmem>>, vector<1x1x8x8xf32>
    %32 = vector.shape_cast %31 : vector<1x1x8x8xf32> to vector<8x8xf32>
    %33 = vector.shape_cast %30 : vector<8x8xf32> to vector<1x1x8x8xf32>
    tpu.vector_store %arg10[%c0_14, %c0_15, %c0_16, %c0_17], %33 {strides = array<i32>} : memref<1x4x8x8xf32, #tpu.memory_space<vmem>>, vector<1x1x8x8xf32>,
    %34 = arith.truncf %30 : vector<8x8xf32> to vector<8x8xbf16>
    %cst_18 = arith.constant dense<0.000000e+00> : vector<8x8xf32>
    %35 = tpu.matmul %34, %19, %cst_18 {dimension_numbers = #tpu.dot_dimension_numbers<[1], [0], [0], [1], [0, 0, 1, 1], [], []>} : vector<8x8xbf16>, vector<8x8xbf16>, vector<8x8xf32> -> vector<8x8xf32>
    %c0_19 = arith.constant 0 : index
    %c0_20 = arith.constant 0 : index
    %36 = vector.load %arg13[%c0_19, %c0_20] : memref<8x32xf32, #tpu.memory_space<vmem>>, vector<8x8xf32>
    tpu.vector_store %arg13[%c0_19, %c0_20], %35 {strides = array<i32>} : memref<8x32xf32, #tpu.memory_space<vmem>>, vector<8x8xf32>,
    %37 = vector.extract_strided_slice %16 {offsets = [0, 8], sizes = [8, 8], strides = [1, 1]} : vector<8x32xbf16> to vector<8x8xbf16>
    %c0_21 = arith.constant 0 : index
    %c8 = arith.constant 8 : index
    %38 = vector.load %arg11[%c0_21, %c8] : memref<8x32xbf16, #tpu.memory_space<vmem>>, vector<8x8xbf16>
    %c0_22 = arith.constant 0 : index
    %c8_23 = arith.constant 8 : index
    %39 = vector.load %arg12[%c0_22, %c8_23] : memref<8x32xbf16, #tpu.memory_space<vmem>>, vector<8x8xbf16>
    %cst_24 = arith.constant dense<0.000000e+00> : vector<8x8xf32>
    %40 = tpu.matmul %37, %38, %cst_24 {dimension_numbers = #tpu.dot_dimension_numbers<[1], [1], [0], [0], [0, 0, 1, 0], [], []>} : vector<8x8xbf16>, vector<8x8xbf16>, vector<8x8xf32> -> vector<8x8xf32>
    %cst_25 = arith.constant dense<0xFF800000> : vector<8xf32>
    %41 = vector.multi_reduction <maximumf>, %40, %cst_25 [1] : vector<8x8xf32> to vector<8xf32>
    %42 = vector.shape_cast %41 : vector<8xf32> to vector<8x1xf32>
    %43 = vector.broadcast %42 : vector<8x1xf32> to vector<8x8xf32>
    %44 = arith.subf %40, %43 : vector<8x8xf32>
    %45 = math.exp %44 : vector<8x8xf32>
    %cst_26 = arith.constant dense<0.000000e+00> : vector<8xf32>
    %46 = vector.multi_reduction <add>, %45, %cst_26 [1] : vector<8x8xf32> to vector<8xf32>
    %47 = vector.shape_cast %46 : vector<8xf32> to vector<8x1xf32>
    %48 = tpu.reciprocal %47 {approx = true} : vector<8x1xf32> -> vector<8x1xf32>
    %49 = vector.broadcast %48 : vector<8x1xf32> to vector<8x8xf32>
    %50 = arith.mulf %45, %49 : vector<8x8xf32>
    %c0_27 = arith.constant 0 : index
    %c1 = arith.constant 1 : index
    %c0_28 = arith.constant 0 : index
    %c0_29 = arith.constant 0 : index
    %51 = vector.load %arg10[%c0_27, %c1, %c0_28, %c0_29] : memref<1x4x8x8xf32, #tpu.memory_space<vmem>>, vector<1x1x8x8xf32>
    %52 = vector.shape_cast %51 : vector<1x1x8x8xf32> to vector<8x8xf32>
    %53 = vector.shape_cast %50 : vector<8x8xf32> to vector<1x1x8x8xf32>
    tpu.vector_store %arg10[%c0_27, %c1, %c0_28, %c0_29], %53 {strides = array<i32>} : memref<1x4x8x8xf32, #tpu.memory_space<vmem>>, vector<1x1x8x8xf32>,
    %54 = arith.truncf %50 : vector<8x8xf32> to vector<8x8xbf16>
    %cst_30 = arith.constant dense<0.000000e+00> : vector<8x8xf32>
    %55 = tpu.matmul %54, %39, %cst_30 {dimension_numbers = #tpu.dot_dimension_numbers<[1], [0], [0], [1], [0, 0, 1, 1], [], []>} : vector<8x8xbf16>, vector<8x8xbf16>, vector<8x8xf32> -> vector<8x8xf32>
    %c0_31 = arith.constant 0 : index
    %c8_32 = arith.constant 8 : index
    %56 = vector.load %arg13[%c0_31, %c8_32] : memref<8x32xf32, #tpu.memory_space<vmem>>, vector<8x8xf32>
    tpu.vector_store %arg13[%c0_31, %c8_32], %55 {strides = array<i32>} : memref<8x32xf32, #tpu.memory_space<vmem>>, vector<8x8xf32>,
    %57 = vector.extract_strided_slice %16 {offsets = [0, 16], sizes = [8, 8], strides = [1, 1]} : vector<8x32xbf16> to vector<8x8xbf16>
    %c0_33 = arith.constant 0 : index
    %c16 = arith.constant 16 : index
    %58 = vector.load %arg11[%c0_33, %c16] : memref<8x32xbf16, #tpu.memory_space<vmem>>, vector<8x8xbf16>
    %c0_34 = arith.constant 0 : index
    %c16_35 = arith.constant 16 : index
    %59 = vector.load %arg12[%c0_34, %c16_35] : memref<8x32xbf16, #tpu.memory_space<vmem>>, vector<8x8xbf16>
    %cst_36 = arith.constant dense<0.000000e+00> : vector<8x8xf32>
    %60 = tpu.matmul %57, %58, %cst_36 {dimension_numbers = #tpu.dot_dimension_numbers<[1], [1], [0], [0], [0, 0, 1, 0], [], []>} : vector<8x8xbf16>, vector<8x8xbf16>, vector<8x8xf32> -> vector<8x8xf32>
    %cst_37 = arith.constant dense<0xFF800000> : vector<8xf32>
    %61 = vector.multi_reduction <maximumf>, %60, %cst_37 [1] : vector<8x8xf32> to vector<8xf32>
    %62 = vector.shape_cast %61 : vector<8xf32> to vector<8x1xf32>
    %63 = vector.broadcast %62 : vector<8x1xf32> to vector<8x8xf32>
    %64 = arith.subf %60, %63 : vector<8x8xf32>
    %65 = math.exp %64 : vector<8x8xf32>
    %cst_38 = arith.constant dense<0.000000e+00> : vector<8xf32>
    %66 = vector.multi_reduction <add>, %65, %cst_38 [1] : vector<8x8xf32> to vector<8xf32>
    %67 = vector.shape_cast %66 : vector<8xf32> to vector<8x1xf32>
    %68 = tpu.reciprocal %67 {approx = true} : vector<8x1xf32> -> vector<8x1xf32>
    %69 = vector.broadcast %68 : vector<8x1xf32> to vector<8x8xf32>
    %70 = arith.mulf %65, %69 : vector<8x8xf32>
    %c0_39 = arith.constant 0 : index
    %c2 = arith.constant 2 : index
    %c0_40 = arith.constant 0 : index
    %c0_41 = arith.constant 0 : index
    %71 = vector.load %arg10[%c0_39, %c2, %c0_40, %c0_41] : memref<1x4x8x8xf32, #tpu.memory_space<vmem>>, vector<1x1x8x8xf32>
    %72 = vector.shape_cast %71 : vector<1x1x8x8xf32> to vector<8x8xf32>
    %73 = vector.shape_cast %70 : vector<8x8xf32> to vector<1x1x8x8xf32>
    tpu.vector_store %arg10[%c0_39, %c2, %c0_40, %c0_41], %73 {strides = array<i32>} : memref<1x4x8x8xf32, #tpu.memory_space<vmem>>, vector<1x1x8x8xf32>,
    %74 = arith.truncf %70 : vector<8x8xf32> to vector<8x8xbf16>
    %cst_42 = arith.constant dense<0.000000e+00> : vector<8x8xf32>
    %75 = tpu.matmul %74, %59, %cst_42 {dimension_numbers = #tpu.dot_dimension_numbers<[1], [0], [0], [1], [0, 0, 1, 1], [], []>} : vector<8x8xbf16>, vector<8x8xbf16>, vector<8x8xf32> -> vector<8x8xf32>
    %c0_43 = arith.constant 0 : index
    %c16_44 = arith.constant 16 : index
    %76 = vector.load %arg13[%c0_43, %c16_44] : memref<8x32xf32, #tpu.memory_space<vmem>>, vector<8x8xf32>
    tpu.vector_store %arg13[%c0_43, %c16_44], %75 {strides = array<i32>} : memref<8x32xf32, #tpu.memory_space<vmem>>, vector<8x8xf32>,
    %77 = vector.extract_strided_slice %16 {offsets = [0, 24], sizes = [8, 8], strides = [1, 1]} : vector<8x32xbf16> to vector<8x8xbf16>
    %c0_45 = arith.constant 0 : index
    %c24 = arith.constant 24 : index
    %78 = vector.load %arg11[%c0_45, %c24] : memref<8x32xbf16, #tpu.memory_space<vmem>>, vector<8x8xbf16>
    %c0_46 = arith.constant 0 : index
    %c24_47 = arith.constant 24 : index
    %79 = vector.load %arg12[%c0_46, %c24_47] : memref<8x32xbf16, #tpu.memory_space<vmem>>, vector<8x8xbf16>
    %cst_48 = arith.constant dense<0.000000e+00> : vector<8x8xf32>
    %80 = tpu.matmul %77, %78, %cst_48 {dimension_numbers = #tpu.dot_dimension_numbers<[1], [1], [0], [0], [0, 0, 1, 0], [], []>} : vector<8x8xbf16>, vector<8x8xbf16>, vector<8x8xf32> -> vector<8x8xf32>
    %cst_49 = arith.constant dense<0xFF800000> : vector<8xf32>
    %81 = vector.multi_reduction <maximumf>, %80, %cst_49 [1] : vector<8x8xf32> to vector<8xf32>
    %82 = vector.shape_cast %81 : vector<8xf32> to vector<8x1xf32>
    %83 = vector.broadcast %82 : vector<8x1xf32> to vector<8x8xf32>
    %84 = arith.subf %80, %83 : vector<8x8xf32>
    %85 = math.exp %84 : vector<8x8xf32>
    %cst_50 = arith.constant dense<0.000000e+00> : vector<8xf32>
    %86 = vector.multi_reduction <add>, %85, %cst_50 [1] : vector<8x8xf32> to vector<8xf32>
    %87 = vector.shape_cast %86 : vector<8xf32> to vector<8x1xf32>
    %88 = tpu.reciprocal %87 {approx = true} : vector<8x1xf32> -> vector<8x1xf32>
    %89 = vector.broadcast %88 : vector<8x1xf32> to vector<8x8xf32>
    %90 = arith.mulf %85, %89 : vector<8x8xf32>
    %c0_51 = arith.constant 0 : index
    %c3 = arith.constant 3 : index
    %c0_52 = arith.constant 0 : index
    %c0_53 = arith.constant 0 : index
    %91 = vector.load %arg10[%c0_51, %c3, %c0_52, %c0_53] : memref<1x4x8x8xf32, #tpu.memory_space<vmem>>, vector<1x1x8x8xf32>
    %92 = vector.shape_cast %91 : vector<1x1x8x8xf32> to vector<8x8xf32>
    %93 = vector.shape_cast %90 : vector<8x8xf32> to vector<1x1x8x8xf32>
    tpu.vector_store %arg10[%c0_51, %c3, %c0_52, %c0_53], %93 {strides = array<i32>} : memref<1x4x8x8xf32, #tpu.memory_space<vmem>>, vector<1x1x8x8xf32>,
    %94 = arith.truncf %90 : vector<8x8xf32> to vector<8x8xbf16>
    %cst_54 = arith.constant dense<0.000000e+00> : vector<8x8xf32>
    %95 = tpu.matmul %94, %79, %cst_54 {dimension_numbers = #tpu.dot_dimension_numbers<[1], [0], [0], [1], [0, 0, 1, 1], [], []>} : vector<8x8xbf16>, vector<8x8xbf16>, vector<8x8xf32> -> vector<8x8xf32>
    %c0_55 = arith.constant 0 : index
    %c24_56 = arith.constant 24 : index
    %96 = vector.load %arg13[%c0_55, %c24_56] : memref<8x32xf32, #tpu.memory_space<vmem>>, vector<8x8xf32>
    tpu.vector_store %arg13[%c0_55, %c24_56], %95 {strides = array<i32>} : memref<8x32xf32, #tpu.memory_space<vmem>>, vector<8x8xf32>,
    %c0_57 = arith.constant 0 : index
    %c0_58 = arith.constant 0 : index
    %97 = vector.load %arg13[%c0_57, %c0_58] : memref<8x32xf32, #tpu.memory_space<vmem>>, vector<8x32xf32>
    %98 = arith.truncf %97 : vector<8x32xf32> to vector<8x32xbf16>
    %c0_59 = arith.constant 0 : index
    %c0_60 = arith.constant 0 : index
    %99 = vector.load %arg7[%c0_59, %c0_60] : memref<32x32xbf16, #tpu.memory_space<vmem>>, vector<32x32xbf16>
    %cst_61 = arith.constant dense<0.000000e+00> : vector<8x32xf32>
    %100 = tpu.matmul %98, %99, %cst_61 {dimension_numbers = #tpu.dot_dimension_numbers<[1], [0], [0], [1], [0, 0, 1, 1], [], []>} : vector<8x32xbf16>, vector<32x32xbf16>, vector<8x32xf32> -> vector<8x32xf32>
    %c0_62 = arith.constant 0 : index
    %c0_63 = arith.constant 0 : index
    %101 = vector.load %arg8[%c0_62, %c0_63] : memref<1x32xf32, #tpu.memory_space<vmem>>, vector<1x32xf32>
    %102 = vector.broadcast %101 : vector<1x32xf32> to vector<8x32xf32>
    %103 = arith.addf %100, %102 : vector<8x32xf32>
    %c0_64 = arith.constant 0 : index
    %c0_65 = arith.constant 0 : index
    %c0_66 = arith.constant 0 : index
    %104 = vector.load %arg9[%c0_64, %c0_65, %c0_66] : memref<1x8x32xf32, #tpu.memory_space<vmem>>, vector<1x8x32xf32>
    %105 = vector.shape_cast %104 : vector<1x8x32xf32> to vector<8x32xf32>
    %106 = vector.shape_cast %103 : vector<8x32xf32> to vector<1x8x32xf32>
    tpu.vector_store %arg9[%c0_64, %c0_65, %c0_66], %106 {strides = array<i32>} : memref<1x8x32xf32, #tpu.memory_space<vmem>>, vector<1x8x32xf32>,
    return
  }
  func.func @transform_0(%arg0: i32, %arg1: i32) -> (i32, i32, i32) {
    %c0_i32 = arith.constant 0 : i32
    %c0_i32_0 = arith.constant 0 : i32
    %c0_i32_1 = arith.constant 0 : i32
    return %arg0, %c0_i32, %c0_i32_0 : i32, i32, i32
  }
  func.func @transform_1(%arg0: i32, %arg1: i32) -> (i32, i32) {
    %c0_i32 = arith.constant 0 : i32
    %c0_i32_0 = arith.constant 0 : i32
    %c0_i32_1 = arith.constant 0 : i32
    return %c0_i32, %c0_i32_0 : i32, i32
  }
  func.func @transform_2(%arg0: i32, %arg1: i32) -> (i32, i32) {
    %c0_i32 = arith.constant 0 : i32
    %c0_i32_0 = arith.constant 0 : i32
    %c0_i32_1 = arith.constant 0 : i32
    return %c0_i32, %c0_i32_0 : i32, i32
  }
  func.func @transform_3(%arg0: i32, %arg1: i32) -> (i32, i32) {
    %c0_i32 = arith.constant 0 : i32
    %c0_i32_0 = arith.constant 0 : i32
    %c0_i32_1 = arith.constant 0 : i32
    return %c0_i32, %c0_i32_0 : i32, i32
  }
  func.func @transform_4(%arg0: i32, %arg1: i32) -> (i32, i32) {
    %c0_i32 = arith.constant 0 : i32
    %c0_i32_0 = arith.constant 0 : i32
    %c0_i32_1 = arith.constant 0 : i32
    return %c0_i32, %c0_i32_0 : i32, i32
  }
  func.func @transform_5(%arg0: i32, %arg1: i32) -> (i32, i32) {
    %c0_i32 = arith.constant 0 : i32
    %c0_i32_0 = arith.constant 0 : i32
    %c0_i32_1 = arith.constant 0 : i32
    return %c0_i32, %c0_i32_0 : i32, i32
  }
  func.func @transform_6(%arg0: i32, %arg1: i32) -> (i32, i32) {
    %c0_i32 = arith.constant 0 : i32
    %c0_i32_0 = arith.constant 0 : i32
    %c0_i32_1 = arith.constant 0 : i32
    return %c0_i32, %c0_i32_0 : i32, i32
  }
  func.func @transform_7(%arg0: i32, %arg1: i32) -> (i32, i32, i32) {
    %c0_i32 = arith.constant 0 : i32
    %c0_i32_0 = arith.constant 0 : i32
    return %arg0, %arg1, %c0_i32 : i32, i32, i32
  }
  func.func @transform_8(%arg0: i32, %arg1: i32) -> (i32, i32, i32, i32) {
    %c0_i32 = arith.constant 0 : i32
    %c0_i32_0 = arith.constant 0 : i32
    %c0_i32_1 = arith.constant 0 : i32
    return %arg0, %c0_i32, %arg1, %c0_i32_0 : i32, i32, i32, i32
  }
}

</mosaic_0001>

<llo_original>
// kernel: tpu_custom_call.1
$region0: #{tpu_custom_call.1}
  #allocation0 [shape = 'u32[]', space=smem, size = 0x4, offset = 0x4, fixed_abs, tag = 'smem constant byte address 0x4 - core index']
  #allocation1 [shape = 'u32[144,128]{1,0:T(1,128)}', space=vmem, size = 0x12000, scoped, tag = 'internal scratch']
  #allocation2 [shape = 'bf16[8,32]{1,0:T(8,128)(2,1)}', space=vmem, size = 0x800, scoped, tag = 'scratch operand']
  #allocation3 [shape = 'bf16[8,32]{1,0:T(8,128)(2,1)}', space=vmem, size = 0x800, scoped, tag = 'scratch operand']
  #allocation4 [shape = 'f32[8,32]{1,0:T(8,128)}', space=vmem, size = 0x1000, scoped, tag = 'scratch operand']
  %s0 = inlined_call_operand.hbm [shape: f32[2,8,32], index: 0, kind: input, shape index: {}]
  %s1 = inlined_call_operand.hbm [shape: bf16[32,32], index: 1, kind: input, shape index: {}]
  %s2 = inlined_call_operand.hbm [shape: f32[1,32], index: 2, kind: input, shape index: {}]
  %s3 = inlined_call_operand.hbm [shape: bf16[32,64], index: 3, kind: input, shape index: {}]
  %s4 = inlined_call_operand.hbm [shape: f32[1,64], index: 4, kind: input, shape index: {}]
  %s5 = inlined_call_operand.hbm [shape: bf16[32,32], index: 5, kind: input, shape index: {}]
  %s6 = inlined_call_operand.hbm [shape: f32[1,32], index: 6, kind: input, shape index: {}]
  %s7 = inlined_call_operand.hbm [shape: f32[2,8,32], index: 7, kind: output, shape index: {0}]
  %s8 = inlined_call_operand.hbm [shape: f32[2,4,8,8], index: 8, kind: output, shape index: {1}]
  %9 = xla_tuple %s7, %s8
  %s10 = sld [smem:[#allocation0]]
  $region101: #{tpu_custom_call.1} parent=0
    _
  %s12 = ssub.s32 1, %s10
  %s13 = scalar_select 0, %s12, %s10
  $region1: #{tpu_custom_call.1} parent=0
    #allocation5 [shape = 'u8[8192]{0}', space=vmem, size = 0x2000, scoped, tag = 'input window, operand 0']
    #allocation6 [shape = 's32[2]{0}', space=sflag, size = 0x8, scoped, tag = 'scoped memory for tpu_custom_call.1']
    #allocation7 [shape = 's32[2]{0}', space=sflag, size = 0x8, scoped, tag = 'scoped memory for tpu_custom_call.1']
    #allocation8 [shape = 'u8[8192]{0}', space=vmem, size = 0x2000, scoped, tag = 'input window, operand 1, single buffered']
    #allocation9 [shape = 's32[1]{0}', space=sflag, size = 0x4, scoped, tag = 'scoped memory for tpu_custom_call.1']
    #allocation10 [shape = 'u8[512]{0}', space=vmem, size = 0x400, scoped, tag = 'input window, operand 2, single buffered']
    #allocation11 [shape = 'u8[8192]{0}', space=vmem, size = 0x2000, scoped, tag = 'input window, operand 3, single buffered']
    #allocation12 [shape = 's32[1]{0}', space=sflag, size = 0x4, scoped, tag = 'scoped memory for tpu_custom_call.1']
    #allocation13 [shape = 'u8[512]{0}', space=vmem, size = 0x400, scoped, tag = 'input window, operand 4, single buffered']
    #allocation14 [shape = 'u8[8192]{0}', space=vmem, size = 0x2000, scoped, tag = 'input window, operand 5, single buffered']
    #allocation15 [shape = 's32[1]{0}', space=sflag, size = 0x4, scoped, tag = 'scoped memory for tpu_custom_call.1']
    #allocation16 [shape = 'u8[512]{0}', space=vmem, size = 0x400, scoped, tag = 'input window, operand 6, single buffered']
    #allocation17 [shape = 'u8[8192]{0}', space=vmem, size = 0x2000, scoped, tag = 'output window, operand 0']
    #allocation18 [shape = 'u8[32768]{0}', space=vmem, size = 0x8000, scoped, tag = 'output window, operand 1']
    #allocation19 [shape = 's32[2]{0}', space=sflag, size = 0x8, scoped, tag = 'scoped memory for tpu_custom_call.1']
    %14 = vsyncpa [#allocation6], 0
    %s15 = scalar_lea.sflag [#allocation6], 1
    %16 = vsyncpa %s15, 0
    %17 = vsyncpa [#allocation9], 0
    %18 = vsyncpa [#allocation12], 0
    %19 = vsyncpa [#allocation15], 0
    %20 = vsyncpa [#allocation7], 0
    %s21 = scalar_lea.sflag [#allocation7], 1
    %22 = vsyncpa %s21, 0
    %23 = vsyncpa [#allocation19], 0
    %s24 = scalar_lea.sflag [#allocation19], 1
    %25 = vsyncpa %s24, 0
    loop: start=0, step=1, limit=4
    $region2: #{tpu_custom_call.1} parent=1 // loop_pre_header
      _
    $region3: #{tpu_custom_call.1} parent=1 // loop_header
      %s27 = sphi 0, %s31
      %p28 = scmp.ge.s32.totalorder %s27, 4
      %s34 = sphi 0, %s46
      %s35 = sphi 0, %s42
      %s36 = sphi 0, %s34
      %s37 = sphi 0, %s35
      %s38 = sphi 0, %s36
      %s39 = sphi 0, %s37
      %s49 = sphi 0, %s51
      %s52 = sphi 0, %s49
      %s53 = sphi 0, %s52
      %s69 = sphi 0, %s53
      %s73 = sphi 0, %s73
      %s75 = sphi 0, %s73
      %s76 = sphi 0, %s75
      %s90 = sphi 0, %s76
      %s94 = sphi 0, %s94
      %s96 = sphi 0, %s94
      %s97 = sphi 0, %s96
      %s111 = sphi 0, %s97
      %s115 = sphi 0, %s115
      %s117 = sphi 0, %s115
      %s118 = sphi 0, %s117
      %s132 = sphi 0, %s118
      %s136 = sphi 0, %s136
      %s138 = sphi 0, %s136
      %s139 = sphi 0, %s138
      %s153 = sphi 0, %s139
      %s157 = sphi 0, %s157
      %s159 = sphi 0, %s157
      %s160 = sphi 0, %s159
      %s174 = sphi 0, %s160
      %s178 = sphi 0, %s178
      %s180 = sphi 0, %s178
      %s181 = sphi 0, %s180
      %s195 = sphi 0, %s181
      %s203 = sphi 0, %s205
      %s206 = sphi 0, %s203
      %s207 = sphi 0, %s206
      %s223 = sphi 0, %s207
      %s231 = sphi 0, %s233
      %s234 = sphi 0, %s231
      %s235 = sphi 0, %s234
      %s251 = sphi 0, %s235
    $region4: #{tpu_custom_call.1} parent=1 // loop_header_branch
      %30 = sbr.rel (%p28) target = $region8
    $region5: #{tpu_custom_call.1} parent=1 // loop_body
      %s32 = ssub.s32 %s27, 1
      %s33 = ssub.s32 %s27, 2
      %s40 = sadd.s32 1, %s35
      %p41 = scmp.ge.s32.totalorder %s40, 1
      %s42 = scalar_select %p41, 0, %s40
      %s43 = sadd.s32 1, %s34
      %s44 = scalar_select %p41, %s43, %s34
      %p45 = scmp.ge.s32.totalorder %s44, 2
      %s46 = scalar_select %p45, 0, %s44
      %s47 = ssub.s32 %s34, %s46
      %p48 = scmp.eq.s32.totalorder %s47, 0
      %s50 = sadd.s32 %s49, 1
      %s51 = scalar_select %p48, %s49, %s50
      %p54 = pneg %p48
      %p55 = scmp.eq.s32.totalorder %s27, 1
      %p56 = por %p54, %p55
      %p57 = scmp.ne.s32.totalorder %s49, %s52
      %p58 = scmp.eq.s32.totalorder %s27, 0
      %p59 = por %p57, %p58
      %p60 = scmp.ne.s32.totalorder %s49, %s52
      %p61 = scmp.eq.s32.totalorder %s32, 1
      %p62 = por %p60, %p61
      %p63 = scmp.ne.s32.totalorder %s52, %s53
      %p64 = scmp.eq.s32.totalorder %s32, 0
      %p65 = por %p63, %p64
      %p66 = scmp.ne.s32.totalorder %s52, %s53
      %p67 = scmp.eq.s32.totalorder %s33, 1
      %p68 = por %p66, %p67
      %p70 = scmp.ne.s32.totalorder %s53, %s69
      %p71 = scmp.eq.s32.totalorder %s33, 0
      %p72 = por %p70, %p71
      %s74 = sadd.s32 %s73, 1
      %p77 = scmp.eq.s32.totalorder %s27, 1
      %p78 = scmp.ne.s32.totalorder %s73, %s75
      %p79 = scmp.eq.s32.totalorder %s27, 0
      %p80 = por %p78, %p79
      %p81 = scmp.ne.s32.totalorder %s73, %s75
      %p82 = scmp.eq.s32.totalorder %s32, 1
      %p83 = por %p81, %p82
      %p84 = scmp.ne.s32.totalorder %s75, %s76
      %p85 = scmp.eq.s32.totalorder %s32, 0
      %p86 = por %p84, %p85
      %p87 = scmp.ne.s32.totalorder %s75, %s76
      %p88 = scmp.eq.s32.totalorder %s33, 1
      %p89 = por %p87, %p88
      %p91 = scmp.ne.s32.totalorder %s76, %s90
      %p92 = scmp.eq.s32.totalorder %s33, 0
      %p93 = por %p91, %p92
      %s95 = sadd.s32 %s94, 1
      %p98 = scmp.eq.s32.totalorder %s27, 1
      %p99 = scmp.ne.s32.totalorder %s94, %s96
      %p100 = scmp.eq.s32.totalorder %s27, 0
      %p101 = por %p99, %p100
      %p102 = scmp.ne.s32.totalorder %s94, %s96
      %p103 = scmp.eq.s32.totalorder %s32, 1
      %p104 = por %p102, %p103
      %p105 = scmp.ne.s32.totalorder %s96, %s97
      %p106 = scmp.eq.s32.totalorder %s32, 0
      %p107 = por %p105, %p106
      %p108 = scmp.ne.s32.totalorder %s96, %s97
      %p109 = scmp.eq.s32.totalorder %s33, 1
      %p110 = por %p108, %p109
      %p112 = scmp.ne.s32.totalorder %s97, %s111
      %p113 = scmp.eq.s32.totalorder %s33, 0
      %p114 = por %p112, %p113
      %s116 = sadd.s32 %s115, 1
      %p119 = scmp.eq.s32.totalorder %s27, 1
      %p120 = scmp.ne.s32.totalorder %s115, %s117
      %p121 = scmp.eq.s32.totalorder %s27, 0
      %p122 = por %p120, %p121
      %p123 = scmp.ne.s32.totalorder %s115, %s117
      %p124 = scmp.eq.s32.totalorder %s32, 1
      %p125 = por %p123, %p124
      %p126 = scmp.ne.s32.totalorder %s117, %s118
      %p127 = scmp.eq.s32.totalorder %s32, 0
      %p128 = por %p126, %p127
      %p129 = scmp.ne.s32.totalorder %s117, %s118
      %p130 = scmp.eq.s32.totalorder %s33, 1
      %p131 = por %p129, %p130
      %p133 = scmp.ne.s32.totalorder %s118, %s132
      %p134 = scmp.eq.s32.totalorder %s33, 0
      %p135 = por %p133, %p134
      %s137 = sadd.s32 %s136, 1
      %p140 = scmp.eq.s32.totalorder %s27, 1
      %p141 = scmp.ne.s32.totalorder %s136, %s138
      %p142 = scmp.eq.s32.totalorder %s27, 0
      %p143 = por %p141, %p142
      %p144 = scmp.ne.s32.totalorder %s136, %s138
      %p145 = scmp.eq.s32.totalorder %s32, 1
      %p146 = por %p144, %p145
      %p147 = scmp.ne.s32.totalorder %s138, %s139
      %p148 = scmp.eq.s32.totalorder %s32, 0
      %p149 = por %p147, %p148
      %p150 = scmp.ne.s32.totalorder %s138, %s139
      %p151 = scmp.eq.s32.totalorder %s33, 1
      %p152 = por %p150, %p151
      %p154 = scmp.ne.s32.totalorder %s139, %s153
      %p155 = scmp.eq.s32.totalorder %s33, 0
      %p156 = por %p154, %p155
      %s158 = sadd.s32 %s157, 1
      %p161 = scmp.eq.s32.totalorder %s27, 1
      %p162 = scmp.ne.s32.totalorder %s157, %s159
      %p163 = scmp.eq.s32.totalorder %s27, 0
      %p164 = por %p162, %p163
      %p165 = scmp.ne.s32.totalorder %s157, %s159
      %p166 = scmp.eq.s32.totalorder %s32, 1
      %p167 = por %p165, %p166
      %p168 = scmp.ne.s32.totalorder %s159, %s160
      %p169 = scmp.eq.s32.totalorder %s32, 0
      %p170 = por %p168, %p169
      %p171 = scmp.ne.s32.totalorder %s159, %s160
      %p172 = scmp.eq.s32.totalorder %s33, 1
      %p173 = por %p171, %p172
      %p175 = scmp.ne.s32.totalorder %s160, %s174
      %p176 = scmp.eq.s32.totalorder %s33, 0
      %p177 = por %p175, %p176
      %s179 = sadd.s32 %s178, 1
      %p182 = scmp.eq.s32.totalorder %s27, 1
      %p183 = scmp.ne.s32.totalorder %s178, %s180
      %p184 = scmp.eq.s32.totalorder %s27, 0
      %p185 = por %p183, %p184
      %p186 = scmp.ne.s32.totalorder %s178, %s180
      %p187 = scmp.eq.s32.totalorder %s32, 1
      %p188 = por %p186, %p187
      %p189 = scmp.ne.s32.totalorder %s180, %s181
      %p190 = scmp.eq.s32.totalorder %s32, 0
      %p191 = por %p189, %p190
      %p192 = scmp.ne.s32.totalorder %s180, %s181
      %p193 = scmp.eq.s32.totalorder %s33, 1
      %p194 = por %p192, %p193
      %p196 = scmp.ne.s32.totalorder %s181, %s195
      %p197 = scmp.eq.s32.totalorder %s33, 0
      %p198 = por %p196, %p197
      %s199 = ssub.s32 %s34, %s46
      %s200 = ssub.s32 %s35, %s42
      %s201 = sor.u32 %s199, %s200
      %p202 = scmp.eq.s32.totalorder %s201, 0
      %s204 = sadd.s32 %s203, 1
      %s205 = scalar_select %p202, %s203, %s204
      %p208 = pneg %p202
      %p209 = scmp.eq.s32.totalorder %s27, 1
      %p210 = por %p208, %p209
      %p211 = scmp.ne.s32.totalorder %s203, %s206
      %p212 = scmp.eq.s32.totalorder %s27, 0
      %p213 = por %p211, %p212
      %p214 = scmp.ne.s32.totalorder %s203, %s206
      %p215 = scmp.eq.s32.totalorder %s32, 1
      %p216 = por %p214, %p215
      %p217 = scmp.ne.s32.totalorder %s206, %s207
      %p218 = scmp.eq.s32.totalorder %s32, 0
      %p219 = por %p217, %p218
      %p220 = scmp.ne.s32.totalorder %s206, %s207
      %p221 = scmp.eq.s32.totalorder %s33, 1
      %p222 = por %p220, %p221
      %p224 = scmp.ne.s32.totalorder %s207, %s223
      %p225 = scmp.eq.s32.totalorder %s33, 0
      %p226 = por %p224, %p225
      %s227 = ssub.s32 %s34, %s46
      %s228 = ssub.s32 %s35, %s42
      %s229 = sor.u32 %s227, %s228
      %p230 = scmp.eq.s32.totalorder %s229, 0
      %s232 = sadd.s32 %s231, 1
      %s233 = scalar_select %p230, %s231, %s232
      %p236 = pneg %p230
      %p237 = scmp.eq.s32.totalorder %s27, 1
      %p238 = por %p236, %p237
      %p239 = scmp.ne.s32.totalorder %s231, %s234
      %p240 = scmp.eq.s32.totalorder %s27, 0
      %p241 = por %p239, %p240
      %p242 = scmp.ne.s32.totalorder %s231, %s234
      %p243 = scmp.eq.s32.totalorder %s32, 1
      %p244 = por %p242, %p243
      %p245 = scmp.ne.s32.totalorder %s234, %s235
      %p246 = scmp.eq.s32.totalorder %s32, 0
      %p247 = por %p245, %p246
      %p248 = scmp.ne.s32.totalorder %s234, %s235
      %p249 = scmp.eq.s32.totalorder %s33, 1
      %p250 = por %p248, %p249
      %p252 = scmp.ne.s32.totalorder %s235, %s251
      %p253 = scmp.eq.s32.totalorder %s33, 0
      %p254 = por %p252, %p253
      %p255 = scmp.le.s32.totalorder 1, %s27
      %p256 = scmp.lt.s32.totalorder %s27, 3
      %p257 = pnand %p255, %p256
      %p258 = pneg %p257
      // Predicated region
      $region9: #{tpu_custom_call.1} parent=5 // pred_check
        _
      $region10: #{tpu_custom_call.1} parent=5 // pred_check_branch
        %260 = sbr.rel (%p257) target = $region12
      $region11: #{tpu_custom_call.1} parent=5 // pred_region
        %s261 = ssub.s32 %s27, 1
        // Predicated region
        $region13: #{tpu_custom_call.1} parent=11 // pred_check
          %p262 = pneg %p86
        $region14: #{tpu_custom_call.1} parent=11 // pred_check_branch
          %264 = sbr.rel (%p262) target = $region16
        $region15: #{tpu_custom_call.1} parent=11 // pred_region
          %s266 = ssub.s32 256, 256
          %267 = vsyncadd [#allocation9], %s266
          %s268 = sshll.u32 [#allocation8], 4
          %s269 = int_to_ptr.vmem [resolvable:$true] %s268
          %274 = dma.hbm_to_vmem [thread:$0]  %s1, 256, %s269, [#allocation9], 64, 64, 4
        $region16: #{tpu_custom_call.1} parent=11 // pred_fallthru
          _
        // Predicated region
        $region17: #{tpu_custom_call.1} parent=11 // pred_check
          %p275 = pneg %p107
        $region18: #{tpu_custom_call.1} parent=11 // pred_check_branch
          %277 = sbr.rel (%p275) target = $region20
        $region19: #{tpu_custom_call.1} parent=11 // pred_region
          %s279 = ssub.s32 16, 16
          %280 = vsyncadd [#allocation9], %s279
          %s282 = sshll.u32 [#allocation10], 4
          %s283 = int_to_ptr.vmem [resolvable:$true] %s282
          %285 = dma.hbm_to_vmem [thread:$0]  %s2, 16, %s283, [#allocation9]
        $region20: #{tpu_custom_call.1} parent=11 // pred_fallthru
          _
        // Predicated region
        $region21: #{tpu_custom_call.1} parent=11 // pred_check
          %p286 = pneg %p128
        $region22: #{tpu_custom_call.1} parent=11 // pred_check_branch
          %288 = sbr.rel (%p286) target = $region24
        $region23: #{tpu_custom_call.1} parent=11 // pred_region
          %s290 = ssub.s32 256, 256
          %291 = vsyncadd [#allocation12], %s290
          %s292 = sshll.u32 [#allocation11], 4
          %s293 = int_to_ptr.vmem [resolvable:$true] %s292
          %298 = dma.hbm_to_vmem [thread:$0]  %s3, 256, %s293, [#allocation12], 64, 64, 4
        $region24: #{tpu_custom_call.1} parent=11 // pred_fallthru
          _
        // Predicated region
        $region25: #{tpu_custom_call.1} parent=11 // pred_check
          %p299 = pneg %p149
        $region26: #{tpu_custom_call.1} parent=11 // pred_check_branch
          %301 = sbr.rel (%p299) target = $region28
        $region27: #{tpu_custom_call.1} parent=11 // pred_region
          %s303 = ssub.s32 16, 16
          %304 = vsyncadd [#allocation12], %s303
          %s306 = sshll.u32 [#allocation13], 4
          %s307 = int_to_ptr.vmem [resolvable:$true] %s306
          %309 = dma.hbm_to_vmem [thread:$0]  %s4, 16, %s307, [#allocation12]
        $region28: #{tpu_custom_call.1} parent=11 // pred_fallthru
          _
        // Predicated region
        $region29: #{tpu_custom_call.1} parent=11 // pred_check
          %p310 = pneg %p170
        $region30: #{tpu_custom_call.1} parent=11 // pred_check_branch
          %312 = sbr.rel (%p310) target = $region32
        $region31: #{tpu_custom_call.1} parent=11 // pred_region
          %s314 = ssub.s32 256, 256
          %315 = vsyncadd [#allocation15], %s314
          %s316 = sshll.u32 [#allocation14], 4
          %s317 = int_to_ptr.vmem [resolvable:$true] %s316
          %322 = dma.hbm_to_vmem [thread:$0]  %s5, 256, %s317, [#allocation15], 64, 64, 4
        $region32: #{tpu_custom_call.1} parent=11 // pred_fallthru
          _
        // Predicated region
        $region33: #{tpu_custom_call.1} parent=11 // pred_check
          %p323 = pneg %p191
        $region34: #{tpu_custom_call.1} parent=11 // pred_check_branch
          %325 = sbr.rel (%p323) target = $region36
        $region35: #{tpu_custom_call.1} parent=11 // pred_region
          %s327 = ssub.s32 16, 16
          %328 = vsyncadd [#allocation15], %s327
          %s330 = sshll.u32 [#allocation16], 4
          %s331 = int_to_ptr.vmem [resolvable:$true] %s330
          %333 = dma.hbm_to_vmem [thread:$0]  %s6, 16, %s331, [#allocation15]
        $region36: #{tpu_custom_call.1} parent=11 // pred_fallthru
          _
      $region12: #{tpu_custom_call.1} parent=5 // pred_fallthru
        _
      %p334 = scmp.lt.s32.totalorder %s27, 2
      // Predicated region
      $region37: #{tpu_custom_call.1} parent=5 // pred_check
        %p335 = pneg %p334
      $region38: #{tpu_custom_call.1} parent=5 // pred_check_branch
        %337 = sbr.rel (%p335) target = $region40
      $region39: #{tpu_custom_call.1} parent=5 // pred_region
        // Predicated region
        $region41: #{tpu_custom_call.1} parent=39 // pred_check
          %p338 = pneg %p59
        $region42: #{tpu_custom_call.1} parent=39 // pred_check_branch
          %340 = sbr.rel (%p338) target = $region44
        $region43: #{tpu_custom_call.1} parent=39 // pred_region
          %s341 = sand.u32 %s49, 1
          %s342 = scalar_lea.sflag [#allocation6], %s341
          %s343 = sand.u32 %s49, 1
          %s344 = smul.addr %s343, 8
          %s345 = scalar_lea.vmem [#allocation5], %s344
          %s347 = ssub.s32 128, 128
          %348 = vsyncadd %s342, %s347
          %s349 = smul.addr %s34, 128
          %s350 = scalar_lea.hbm %s0, %s349
          %s352 = sshll.u32 %s345, 4
          %s353 = int_to_ptr.vmem [resolvable:$true] %s352
          %355 = dma.hbm_to_vmem [thread:$0]  %s350, 128, %s353, %s342
        $region44: #{tpu_custom_call.1} parent=39 // pred_fallthru
          _
      $region40: #{tpu_custom_call.1} parent=5 // pred_fallthru
        _
      %p356 = scmp.le.s32.totalorder 1, %s27
      %p357 = scmp.lt.s32.totalorder %s27, 3
      %p358 = pnand %p356, %p357
      %p359 = pneg %p358
      // Predicated region
      $region45: #{tpu_custom_call.1} parent=5 // pred_check
        _
      $region46: #{tpu_custom_call.1} parent=5 // pred_check_branch
        %361 = sbr.rel (%p358) target = $region48
      $region47: #{tpu_custom_call.1} parent=5 // pred_region
        %s362 = ssub.s32 %s27, 1
        %s363 = sand.u32 %s52, 1
        %s364 = scalar_lea.sflag [#allocation6], %s363
        %s365 = sand.u32 %s52, 1
        %s366 = smul.addr %s365, 8
        %s367 = scalar_lea.vmem [#allocation5], %s366
        // Predicated region
        $region49: #{tpu_custom_call.1} parent=47 // pred_check
          %p368 = pneg %p65
        $region50: #{tpu_custom_call.1} parent=47 // pred_check_branch
          %370 = sbr.rel (%p368) target = $region52
        $region51: #{tpu_custom_call.1} parent=47 // pred_region
          %371 = dma.done %s364, 128
        $region52: #{tpu_custom_call.1} parent=47 // pred_fallthru
          _
        // Predicated region
        $region53: #{tpu_custom_call.1} parent=47 // pred_check
          %p372 = pneg %p86
        $region54: #{tpu_custom_call.1} parent=47 // pred_check_branch
          %374 = sbr.rel (%p372) target = $region56
        $region55: #{tpu_custom_call.1} parent=47 // pred_region
          %375 = dma.done [#allocation9], 256
        $region56: #{tpu_custom_call.1} parent=47 // pred_fallthru
          _
        // Predicated region
        $region57: #{tpu_custom_call.1} parent=47 // pred_check
          %p376 = pneg %p107
        $region58: #{tpu_custom_call.1} parent=47 // pred_check_branch
          %378 = sbr.rel (%p376) target = $region60
        $region59: #{tpu_custom_call.1} parent=47 // pred_region
          %379 = dma.done [#allocation9], 16
        $region60: #{tpu_custom_call.1} parent=47 // pred_fallthru
          _
        // Predicated region
        $region61: #{tpu_custom_call.1} parent=47 // pred_check
          %p380 = pneg %p128
        $region62: #{tpu_custom_call.1} parent=47 // pred_check_branch
          %382 = sbr.rel (%p380) target = $region64
        $region63: #{tpu_custom_call.1} parent=47 // pred_region
          %383 = dma.done [#allocation12], 256
        $region64: #{tpu_custom_call.1} parent=47 // pred_fallthru
          _
        // Predicated region
        $region65: #{tpu_custom_call.1} parent=47 // pred_check
          %p384 = pneg %p149
        $region66: #{tpu_custom_call.1} parent=47 // pred_check_branch
          %386 = sbr.rel (%p384) target = $region68
        $region67: #{tpu_custom_call.1} parent=47 // pred_region
          %387 = dma.done [#allocation12], 16
        $region68: #{tpu_custom_call.1} parent=47 // pred_fallthru
          _
        // Predicated region
        $region69: #{tpu_custom_call.1} parent=47 // pred_check
          %p388 = pneg %p170
        $region70: #{tpu_custom_call.1} parent=47 // pred_check_branch
          %390 = sbr.rel (%p388) target = $region72
        $region71: #{tpu_custom_call.1} parent=47 // pred_region
          %391 = dma.done [#allocation15], 256
        $region72: #{tpu_custom_call.1} parent=47 // pred_fallthru
          _
        // Predicated region
        $region73: #{tpu_custom_call.1} parent=47 // pred_check
          %p392 = pneg %p191
        $region74: #{tpu_custom_call.1} parent=47 // pred_check_branch
          %394 = sbr.rel (%p392) target = $region76
        $region75: #{tpu_custom_call.1} parent=47 // pred_region
          %395 = dma.done [#allocation15], 16
        $region76: #{tpu_custom_call.1} parent=47 // pred_fallthru
          _
        %s396 = sand.u32 %s52, 1
        %s397 = scalar_lea.sflag [#allocation6], %s396
        %s398 = sand.u32 %s52, 1
        %s399 = smul.addr %s398, 8
        %s400 = scalar_lea.vmem [#allocation5], %s399
        %p401 = pneg %p65
        %p402 = pneg %p62
        %p403 = pneg %p86
        %p404 = pneg %p83
        %p405 = pneg %p107
        %p406 = pneg %p104
        %p407 = pneg %p128
        %p408 = pneg %p125
        %p409 = pneg %p149
        %p410 = pneg %p146
        %p411 = pneg %p170
        %p412 = pneg %p167
        %p413 = pneg %p191
        %p414 = pneg %p188
        %p415 = pneg %p219
        %p416 = pneg %p216
        %s417 = sand.u32 %s206, 1
        %s418 = scalar_lea.sflag [#allocation7], %s417
        %s419 = sand.u32 %s206, 1
        %s420 = smul.addr %s419, 8
        %s421 = scalar_lea.vmem [#allocation17], %s420
        %p422 = pneg %p247
        %p423 = pneg %p244
        %s424 = sand.u32 %s234, 1
        %s425 = scalar_lea.sflag [#allocation19], %s424
        %s426 = sand.u32 %s234, 1
        %s427 = smul.addr %s426, 32
        %s428 = scalar_lea.vmem [#allocation18], %s427
        %p430 = scmp.eq.s32.totalorder %s37, 0
        // Predicated region
        $region77: #{tpu_custom_call.1} parent=47 // pred_check
          %p431 = pneg %p430
        $region78: #{tpu_custom_call.1} parent=47 // pred_check_branch
          %433 = sbr.rel (%p431) target = $region80
        $region79: #{tpu_custom_call.1} parent=47 // pred_region
          %v434 = vld [vmem:[%s367] sm:$0xff]
          %v435 = vpack.c.bf16 %v434, %v434
          %v436 = vld [vmem:[#allocation11] sm:$0xf]
          %v437 = vld [vmem:[#allocation11 + $0x4] sm:$0xf]
          %v438 = vld [vmem:[#allocation11 + $0x8] sm:$0xf]
          %v439 = vld [vmem:[#allocation11 + $0xc] sm:$0xf]
          %v440 = vld [vmem:[#allocation13] sm:$0x1]
          %v442 = vlaneseq
          %v443 = vshrl.u32 %v442, 7
          %v444 = vsub.s32 0, %v443
          %v445 = vrot.slane %v440, %v444
          %v451 = vunpack.c.l.b16 %v436
          %v452 = vunpack.c.l.b16 %v437
          %v453 = vunpack.c.l.b16 %v438
          %v454 = vunpack.c.l.b16 %v439
          %v455 = vpack.c.b16 %v452, %v451
          %v456 = vpack.c.b16 %v454, %v453
          %vm459 = vcmask 261120
          %v461 = vsel %vm459, %v435, 0
          %463 = vmatprep.subr.bf16.mxu0 0
          %464 = vmatpush1.bf16.msra.mxu0 %v455
          %465 = vmatprep.subr.bf16.mxu0 0
          %466 = vmatpush1.bf16.msra.mxu0 %v456
          %467 = vmatprep.subr.bf16.mxu0 0
          %468 = vmatpush1.bf16.msra.mxu0 0
          %469 = vmatprep.subr.bf16.mxu0 0
          %470 = vmatpush1.bf16.msra.mxu0 0
          %471 = vmatprep.subr.bf16.mxu0 0
          %472 = vmatpush1.bf16.msra.mxu0 0
          %473 = vmatprep.subr.bf16.mxu0 0
          %474 = vmatpush1.bf16.msra.mxu0 0
          %475 = vmatprep.subr.bf16.mxu0 0
          %476 = vmatpush1.bf16.msra.mxu0 0
          %477 = vmatprep.subr.bf16.mxu0 0
          %478 = vmatpush1.bf16.msra.mxu0 0
          %479 = vmatprep.subr.bf16.mxu0 0
          %480 = vmatpush1.bf16.msra.mxu0 0
          %481 = vmatprep.subr.bf16.mxu0 0
          %482 = vmatpush1.bf16.msra.mxu0 0
          %483 = vmatprep.subr.bf16.mxu0 0
          %484 = vmatpush1.bf16.msra.mxu0 0
          %485 = vmatprep.subr.bf16.mxu0 0
          %486 = vmatpush1.bf16.msra.mxu0 0
          %487 = vmatprep.subr.bf16.mxu0 0
          %488 = vmatpush1.bf16.msra.mxu0 0
          %489 = vmatprep.subr.bf16.mxu0 0
          %490 = vmatpush1.bf16.msra.mxu0 0
          %491 = vmatprep.subr.bf16.mxu0 0
          %492 = vmatpush1.bf16.msra.mxu0 0
          %493 = vmatprep.subr.bf16.mxu0 0
          %494 = vmatpush1.bf16.msra.mxu0 0
          %495 = vmatprep.mubr.bf16.mxu0 0
          %496 = vmatmul.mubr.bf16.gmra.mrb[0].mxu0 %v461
          %v497 = vpop.f32.mrb[0].mxu0
          %v498 = vadd.f32 %v445, %v497
          %v499 = vpop.f32.mrb[0].mxu0
          %v500 = vpop.f32.mrb[0].mxu0
          %v501 = vpop.f32.mrb[0].mxu0
          %502 = vdwg.mxu0
          %v503 = vpack.c.bf16 %v498, %v498
          %vm504 = vcmask 257024
          %505 = vst.msk [vmem:[#allocation2] sm:$0xf] %vm504, %v503
          %v507 = vunpack.c.l.b16 %v503
          %v508 = vpack.c.b16 %v507, %v507
          %509 = vrot.lane.b32.xlu0 %v508, 96
          %v510 = vpop.permute.xlu0 %509
          %512 = vst.msk [vmem:[#allocation3] sm:$0xf] %vm504, %v510
        $region80: #{tpu_custom_call.1} parent=47 // pred_fallthru
          _
        %s513 = smul.u32 %s37, 8
        %s514 = scalar_lea.vmem %s367, %s513 [#allocation5]
        %v515 = vld [vmem:[%s514] sm:$0xff]
        %v516 = vpack.c.bf16 %v515, %v515
        %v517 = vld [vmem:[#allocation8] sm:$0xf]
        %v518 = vld [vmem:[#allocation8 + $0x4] sm:$0xf]
        %v519 = vld [vmem:[#allocation8 + $0x8] sm:$0xf]
        %v520 = vld [vmem:[#allocation8 + $0xc] sm:$0xf]
        %v521 = vld [vmem:[#allocation10] sm:$0x1]
        %v523 = vlaneseq
        %v524 = vshrl.u32 %v523, 7
        %v525 = vsub.s32 0, %v524
        %v526 = vrot.slane %v521, %v525
        %v532 = vunpack.c.l.b16 %v517
        %v533 = vunpack.c.l.b16 %v518
        %v534 = vunpack.c.l.b16 %v519
        %v535 = vunpack.c.l.b16 %v520
        %v536 = vpack.c.b16 %v533, %v532
        %v537 = vpack.c.b16 %v535, %v534
        %vm540 = vcmask 261120
        %v542 = vsel %vm540, %v516, 0
        %544 = vmatprep.subr.bf16.mxu0 0
        %545 = vmatpush1.bf16.msra.mxu0 %v536
        %546 = vmatprep.subr.bf16.mxu0 0
        %547 = vmatpush1.bf16.msra.mxu0 %v537
        %548 = vmatprep.subr.bf16.mxu0 0
        %549 = vmatpush1.bf16.msra.mxu0 0
        %550 = vmatprep.subr.bf16.mxu0 0
        %551 = vmatpush1.bf16.msra.mxu0 0
        %552 = vmatprep.subr.bf16.mxu0 0
        %553 = vmatpush1.bf16.msra.mxu0 0
        %554 = vmatprep.subr.bf16.mxu0 0
        %555 = vmatpush1.bf16.msra.mxu0 0
        %556 = vmatprep.subr.bf16.mxu0 0
        %557 = vmatpush1.bf16.msra.mxu0 0
        %558 = vmatprep.subr.bf16.mxu0 0
        %559 = vmatpush1.bf16.msra.mxu0 0
        %560 = vmatprep.subr.bf16.mxu0 0
        %561 = vmatpush1.bf16.msra.mxu0 0
        %562 = vmatprep.subr.bf16.mxu0 0
        %563 = vmatpush1.bf16.msra.mxu0 0
        %564 = vmatprep.subr.bf16.mxu0 0
        %565 = vmatpush1.bf16.msra.mxu0 0
        %566 = vmatprep.subr.bf16.mxu0 0
        %567 = vmatpush1.bf16.msra.mxu0 0
        %568 = vmatprep.subr.bf16.mxu0 0
        %569 = vmatpush1.bf16.msra.mxu0 0
        %570 = vmatprep.subr.bf16.mxu0 0
        %571 = vmatpush1.bf16.msra.mxu0 0
        %572 = vmatprep.subr.bf16.mxu0 0
        %573 = vmatpush1.bf16.msra.mxu0 0
        %574 = vmatprep.subr.bf16.mxu0 0
        %575 = vmatpush1.bf16.msra.mxu0 0
        %576 = vmatprep.mubr.bf16.mxu0 0
        %577 = vmatmul.mubr.bf16.gmra.mrb[0].mxu0 %v542
        %v578 = vpop.f32.mrb[0].mxu0
        %v579 = vadd.f32 %v526, %v578
        %v580 = vpop.f32.mrb[0].mxu0
        %v581 = vpop.f32.mrb[0].mxu0
        %v582 = vpop.f32.mrb[0].mxu0
        %583 = vdwg.mxu0
        %v584 = vmul.f32 %v579, 0.35355338
        %v585 = vpack.c.bf16 %v584, %v584
        %v586 = vld [vmem:[#allocation2] sm:$0xf]
        %v587 = vld [vmem:[#allocation3] sm:$0xf]
        %vm588 = vcmask 64512
        %v590 = vsel %vm588, %v585, 0
        %v593 = vsel %vm588, %v586, 0
        %595 = vmatprep.subr.bf16.mxu0 0
        %596 = vmatpush1.bf16.xpose.msra.mxu0 %v593
        %597 = vmatprep.subr.bf16.mxu0 0
        %598 = vmatpush1.bf16.xpose.msra.mxu0 0
        %599 = vmatprep.subr.bf16.mxu0 0
        %600 = vmatpush1.bf16.xpose.msra.mxu0 0
        %601 = vmatprep.subr.bf16.mxu0 0
        %602 = vmatpush1.bf16.xpose.msra.mxu0 0
        %603 = vmatprep.subr.bf16.mxu0 0
        %604 = vmatpush1.bf16.xpose.msra.mxu0 0
        %605 = vmatprep.subr.bf16.mxu0 0
        %606 = vmatpush1.bf16.xpose.msra.mxu0 0
        %607 = vmatprep.subr.bf16.mxu0 0
        %608 = vmatpush1.bf16.xpose.msra.mxu0 0
        %609 = vmatprep.subr.bf16.mxu0 0
        %610 = vmatpush1.bf16.xpose.msra.mxu0 0
        %611 = vmatprep.subr.bf16.mxu0 0
        %612 = vmatpush1.bf16.xpose.msra.mxu0 0
        %613 = vmatprep.subr.bf16.mxu0 0
        %614 = vmatpush1.bf16.xpose.msra.mxu0 0
        %615 = vmatprep.subr.bf16.mxu0 0
        %616 = vmatpush1.bf16.xpose.msra.mxu0 0
        %617 = vmatprep.subr.bf16.mxu0 0
        %618 = vmatpush1.bf16.xpose.msra.mxu0 0
        %619 = vmatprep.subr.bf16.mxu0 0
        %620 = vmatpush1.bf16.xpose.msra.mxu0 0
        %621 = vmatprep.subr.bf16.mxu0 0
        %622 = vmatpush1.bf16.xpose.msra.mxu0 0
        %623 = vmatprep.subr.bf16.mxu0 0
        %624 = vmatpush1.bf16.xpose.msra.mxu0 0
        %625 = vmatprep.subr.bf16.mxu0 0
        %626 = vmatpush1.bf16.xpose.msra.mxu0 0
        %627 = vmatprep.mubr.bf16.mxu0 0
        %628 = vmatmul.mubr.bf16.gmra.mrb[0].mxu0 %v590
        %v629 = vpop.f32.mrb[0].mxu0
        %v630 = vadd.f32 0.0, %v629
        %v631 = vpop.f32.mrb[0].mxu0
        %v632 = vpop.f32.mrb[0].mxu0
        %v633 = vpop.f32.mrb[0].mxu0
        %634 = vdwg.mxu0
        %v635 = vsel %vm588, %v630, -inf
        %636 = vmax.xlane.f32.xlu0 %v635
        %v637 = vpop.xlane.xlu0 %636
        %v638 = vsub.f32 %v630, %v637
        %v639 = vmul.f32 %v638, 1.442695
        %v640 = vpow.pop %v639
        %v641 = vsel %vm588, %v640, 0.0
        %642 = vadd.xlane.f32.xlu0 %v641
        %v643 = vpop.xlane.xlu0 %642
        %v644 = vrcp.pop %v643
        %v645 = vmul.f32 %v640, %v644
        %646 = vst.msk [vmem:[%s428] sm:$0xff] %vm588, %v645
        %v647 = vpack.c.bf16 %v645, %v645
        %v649 = vsel %vm588, %v647, 0
        %vm651 = vcmask 1043456
        %v653 = vsel %vm651, %v587, 0
        %655 = vmatprep.subr.bf16.mxu0 0
        %656 = vmatpush1.bf16.msra.mxu0 %v653
        %657 = vmatprep.subr.bf16.mxu0 0
        %658 = vmatpush1.bf16.msra.mxu0 0
        %659 = vmatprep.subr.bf16.mxu0 0
        %660 = vmatpush1.bf16.msra.mxu0 0
        %661 = vmatprep.subr.bf16.mxu0 0
        %662 = vmatpush1.bf16.msra.mxu0 0
        %663 = vmatprep.subr.bf16.mxu0 0
        %664 = vmatpush1.bf16.msra.mxu0 0
        %665 = vmatprep.subr.bf16.mxu0 0
        %666 = vmatpush1.bf16.msra.mxu0 0
        %667 = vmatprep.subr.bf16.mxu0 0
        %668 = vmatpush1.bf16.msra.mxu0 0
        %669 = vmatprep.subr.bf16.mxu0 0
        %670 = vmatpush1.bf16.msra.mxu0 0
        %671 = vmatprep.subr.bf16.mxu0 0
        %672 = vmatpush1.bf16.msra.mxu0 0
        %673 = vmatprep.subr.bf16.mxu0 0
        %674 = vmatpush1.bf16.msra.mxu0 0
        %675 = vmatprep.subr.bf16.mxu0 0
        %676 = vmatpush1.bf16.msra.mxu0 0
        %677 = vmatprep.subr.bf16.mxu0 0
        %678 = vmatpush1.bf16.msra.mxu0 0
        %679 = vmatprep.subr.bf16.mxu0 0
        %680 = vmatpush1.bf16.msra.mxu0 0
        %681 = vmatprep.subr.bf16.mxu0 0
        %682 = vmatpush1.bf16.msra.mxu0 0
        %683 = vmatprep.subr.bf16.mxu0 0
        %684 = vmatpush1.bf16.msra.mxu0 0
        %685 = vmatprep.subr.bf16.mxu0 0
        %686 = vmatpush1.bf16.msra.mxu0 0
        %687 = vmatprep.mubr.bf16.mxu0 0
        %688 = vmatmul.mubr.bf16.gmra.mrb[0].mxu0 %v649
        %v689 = vpop.f32.mrb[0].mxu0
        %v690 = vadd.f32 0.0, %v689
        %v691 = vpop.f32.mrb[0].mxu0
        %v692 = vpop.f32.mrb[0].mxu0
        %v693 = vpop.f32.mrb[0].mxu0
        %694 = vdwg.mxu0
        %695 = vst.msk [vmem:[#allocation4] sm:$0xff] %vm588, %v690
        %v696 = vld [vmem:[#allocation2] sm:$0xf]
        %v697 = vld [vmem:[#allocation3] sm:$0xf]
        %699 = vrot.lane.b32.xlu0 %v585, 120
        %v700 = vpop.permute.xlu0 %699
        %v702 = vunpack.c.l.b16 %v696
        %v703 = vpack.c.b16 %v702, %v702
        %704 = vrot.lane.b32.xlu0 %v703, 120
        %v705 = vpop.permute.xlu0 %704
        %v707 = vsel %vm588, %v700, 0
        %v710 = vsel %vm588, %v705, 0
        %712 = vmatprep.subr.bf16.mxu0 0
        %713 = vmatpush1.bf16.xpose.msra.mxu0 %v710
        %714 = vmatprep.subr.bf16.mxu0 0
        %715 = vmatpush1.bf16.xpose.msra.mxu0 0
        %716 = vmatprep.subr.bf16.mxu0 0
        %717 = vmatpush1.bf16.xpose.msra.mxu0 0
        %718 = vmatprep.subr.bf16.mxu0 0
        %719 = vmatpush1.bf16.xpose.msra.mxu0 0
        %720 = vmatprep.subr.bf16.mxu0 0
        %721 = vmatpush1.bf16.xpose.msra.mxu0 0
        %722 = vmatprep.subr.bf16.mxu0 0
        %723 = vmatpush1.bf16.xpose.msra.mxu0 0
        %724 = vmatprep.subr.bf16.mxu0 0
        %725 = vmatpush1.bf16.xpose.msra.mxu0 0
        %726 = vmatprep.subr.bf16.mxu0 0
        %727 = vmatpush1.bf16.xpose.msra.mxu0 0
        %728 = vmatprep.subr.bf16.mxu0 0
        %729 = vmatpush1.bf16.xpose.msra.mxu0 0
        %730 = vmatprep.subr.bf16.mxu0 0
        %731 = vmatpush1.bf16.xpose.msra.mxu0 0
        %732 = vmatprep.subr.bf16.mxu0 0
        %733 = vmatpush1.bf16.xpose.msra.mxu0 0
        %734 = vmatprep.subr.bf16.mxu0 0
        %735 = vmatpush1.bf16.xpose.msra.mxu0 0
        %736 = vmatprep.subr.bf16.mxu0 0
        %737 = vmatpush1.bf16.xpose.msra.mxu0 0
        %738 = vmatprep.subr.bf16.mxu0 0
        %739 = vmatpush1.bf16.xpose.msra.mxu0 0
        %740 = vmatprep.subr.bf16.mxu0 0
        %741 = vmatpush1.bf16.xpose.msra.mxu0 0
        %742 = vmatprep.subr.bf16.mxu0 0
        %743 = vmatpush1.bf16.xpose.msra.mxu0 0
        %744 = vmatprep.mubr.bf16.mxu0 0
        %745 = vmatmul.mubr.bf16.gmra.mrb[0].mxu0 %v707
        %v746 = vpop.f32.mrb[0].mxu0
        %v747 = vadd.f32 0.0, %v746
        %v748 = vpop.f32.mrb[0].mxu0
        %v749 = vpop.f32.mrb[0].mxu0
        %v750 = vpop.f32.mrb[0].mxu0
        %751 = vdwg.mxu0
        %v752 = vsel %vm588, %v747, -inf
        %753 = vmax.xlane.f32.xlu0 %v752
        %v754 = vpop.xlane.xlu0 %753
        %v755 = vsub.f32 %v747, %v754
        %v756 = vmul.f32 %v755, 1.442695
        %v757 = vpow.pop %v756
        %v758 = vsel %vm588, %v757, 0.0
        %759 = vadd.xlane.f32.xlu0 %v758
        %v760 = vpop.xlane.xlu0 %759
        %v761 = vrcp.pop %v760
        %v762 = vmul.f32 %v757, %v761
        %s763 = scalar_lea.vmem %s428, 8 [#allocation18]
        %764 = vst.msk [vmem:[%s763] sm:$0xff] %vm588, %v762
        %v765 = vpack.c.bf16 %v762, %v762
        %v767 = vunpack.c.l.b16 %v697
        %v768 = vpack.c.b16 %v767, %v767
        %769 = vrot.lane.b32.xlu0 %v768, 120
        %v770 = vpop.permute.xlu0 %769
        %v772 = vsel %vm588, %v765, 0
        %v775 = vsel %vm651, %v770, 0
        %777 = vmatprep.subr.bf16.mxu0 0
        %778 = vmatpush1.bf16.msra.mxu0 %v775
        %779 = vmatprep.subr.bf16.mxu0 0
        %780 = vmatpush1.bf16.msra.mxu0 0
        %781 = vmatprep.subr.bf16.mxu0 0
        %782 = vmatpush1.bf16.msra.mxu0 0
        %783 = vmatprep.subr.bf16.mxu0 0
        %784 = vmatpush1.bf16.msra.mxu0 0
        %785 = vmatprep.subr.bf16.mxu0 0
        %786 = vmatpush1.bf16.msra.mxu0 0
        %787 = vmatprep.subr.bf16.mxu0 0
        %788 = vmatpush1.bf16.msra.mxu0 0
        %789 = vmatprep.subr.bf16.mxu0 0
        %790 = vmatpush1.bf16.msra.mxu0 0
        %791 = vmatprep.subr.bf16.mxu0 0
        %792 = vmatpush1.bf16.msra.mxu0 0
        %793 = vmatprep.subr.bf16.mxu0 0
        %794 = vmatpush1.bf16.msra.mxu0 0
        %795 = vmatprep.subr.bf16.mxu0 0
        %796 = vmatpush1.bf16.msra.mxu0 0
        %797 = vmatprep.subr.bf16.mxu0 0
        %798 = vmatpush1.bf16.msra.mxu0 0
        %799 = vmatprep.subr.bf16.mxu0 0
        %800 = vmatpush1.bf16.msra.mxu0 0
        %801 = vmatprep.subr.bf16.mxu0 0
        %802 = vmatpush1.bf16.msra.mxu0 0
        %803 = vmatprep.subr.bf16.mxu0 0
        %804 = vmatpush1.bf16.msra.mxu0 0
        %805 = vmatprep.subr.bf16.mxu0 0
        %806 = vmatpush1.bf16.msra.mxu0 0
        %807 = vmatprep.subr.bf16.mxu0 0
        %808 = vmatpush1.bf16.msra.mxu0 0
        %809 = vmatprep.mubr.bf16.mxu0 0
        %810 = vmatmul.mubr.bf16.gmra.mrb[0].mxu0 %v772
        %v811 = vpop.f32.mrb[0].mxu0
        %v812 = vadd.f32 0.0, %v811
        %v813 = vpop.f32.mrb[0].mxu0
        %v814 = vpop.f32.mrb[0].mxu0
        %v815 = vpop.f32.mrb[0].mxu0
        %816 = vdwg.mxu0
        %818 = vrot.lane.b32.xlu0 %v812, 8
        %v819 = vpop.permute.xlu0 %818
        %vm821 = vcmask 130112
        %822 = vst.msk [vmem:[#allocation4] sm:$0xff] %vm821, %v819
        %v823 = vld [vmem:[#allocation2] sm:$0xf]
        %v824 = vld [vmem:[#allocation3] sm:$0xf]
        %825 = vrot.lane.b32.xlu0 %v585, 112
        %v826 = vpop.permute.xlu0 %825
        %v828 = vunpack.c.l.b16 %v823
        %v829 = vpack.c.b16 %v828, %v828
        %830 = vrot.lane.b32.xlu0 %v829, 112
        %v831 = vpop.permute.xlu0 %830
        %v833 = vsel %vm588, %v826, 0
        %v836 = vsel %vm588, %v831, 0
        %838 = vmatprep.subr.bf16.mxu0 0
        %839 = vmatpush1.bf16.xpose.msra.mxu0 %v836
        %840 = vmatprep.subr.bf16.mxu0 0
        %841 = vmatpush1.bf16.xpose.msra.mxu0 0
        %842 = vmatprep.subr.bf16.mxu0 0
        %843 = vmatpush1.bf16.xpose.msra.mxu0 0
        %844 = vmatprep.subr.bf16.mxu0 0
        %845 = vmatpush1.bf16.xpose.msra.mxu0 0
        %846 = vmatprep.subr.bf16.mxu0 0
        %847 = vmatpush1.bf16.xpose.msra.mxu0 0
        %848 = vmatprep.subr.bf16.mxu0 0
        %849 = vmatpush1.bf16.xpose.msra.mxu0 0
        %850 = vmatprep.subr.bf16.mxu0 0
        %851 = vmatpush1.bf16.xpose.msra.mxu0 0
        %852 = vmatprep.subr.bf16.mxu0 0
        %853 = vmatpush1.bf16.xpose.msra.mxu0 0
        %854 = vmatprep.subr.bf16.mxu0 0
        %855 = vmatpush1.bf16.xpose.msra.mxu0 0
        %856 = vmatprep.subr.bf16.mxu0 0
        %857 = vmatpush1.bf16.xpose.msra.mxu0 0
        %858 = vmatprep.subr.bf16.mxu0 0
        %859 = vmatpush1.bf16.xpose.msra.mxu0 0
        %860 = vmatprep.subr.bf16.mxu0 0
        %861 = vmatpush1.bf16.xpose.msra.mxu0 0
        %862 = vmatprep.subr.bf16.mxu0 0
        %863 = vmatpush1.bf16.xpose.msra.mxu0 0
        %864 = vmatprep.subr.bf16.mxu0 0
        %865 = vmatpush1.bf16.xpose.msra.mxu0 0
        %866 = vmatprep.subr.bf16.mxu0 0
        %867 = vmatpush1.bf16.xpose.msra.mxu0 0
        %868 = vmatprep.subr.bf16.mxu0 0
        %869 = vmatpush1.bf16.xpose.msra.mxu0 0
        %870 = vmatprep.mubr.bf16.mxu0 0
        %871 = vmatmul.mubr.bf16.gmra.mrb[0].mxu0 %v833
        %v872 = vpop.f32.mrb[0].mxu0
        %v873 = vadd.f32 0.0, %v872
        %v874 = vpop.f32.mrb[0].mxu0
        %v875 = vpop.f32.mrb[0].mxu0
        %v876 = vpop.f32.mrb[0].mxu0
        %877 = vdwg.mxu0
        %v878 = vsel %vm588, %v873, -inf
        %879 = vmax.xlane.f32.xlu0 %v878
        %v880 = vpop.xlane.xlu0 %879
        %v881 = vsub.f32 %v873, %v880
        %v882 = vmul.f32 %v881, 1.442695
        %v883 = vpow.pop %v882
        %v884 = vsel %vm588, %v883, 0.0
        %885 = vadd.xlane.f32.xlu0 %v884
        %v886 = vpop.xlane.xlu0 %885
        %v887 = vrcp.pop %v886
        %v888 = vmul.f32 %v883, %v887
        %s889 = scalar_lea.vmem %s428, 16 [#allocation18]
        %890 = vst.msk [vmem:[%s889] sm:$0xff] %vm588, %v888
        %v891 = vpack.c.bf16 %v888, %v888
        %v893 = vunpack.c.l.b16 %v824
        %v894 = vpack.c.b16 %v893, %v893
        %895 = vrot.lane.b32.xlu0 %v894, 112
        %v896 = vpop.permute.xlu0 %895
        %v898 = vsel %vm588, %v891, 0
        %v901 = vsel %vm651, %v896, 0
        %903 = vmatprep.subr.bf16.mxu0 0
        %904 = vmatpush1.bf16.msra.mxu0 %v901
        %905 = vmatprep.subr.bf16.mxu0 0
        %906 = vmatpush1.bf16.msra.mxu0 0
        %907 = vmatprep.subr.bf16.mxu0 0
        %908 = vmatpush1.bf16.msra.mxu0 0
        %909 = vmatprep.subr.bf16.mxu0 0
        %910 = vmatpush1.bf16.msra.mxu0 0
        %911 = vmatprep.subr.bf16.mxu0 0
        %912 = vmatpush1.bf16.msra.mxu0 0
        %913 = vmatprep.subr.bf16.mxu0 0
        %914 = vmatpush1.bf16.msra.mxu0 0
        %915 = vmatprep.subr.bf16.mxu0 0
        %916 = vmatpush1.bf16.msra.mxu0 0
        %917 = vmatprep.subr.bf16.mxu0 0
        %918 = vmatpush1.bf16.msra.mxu0 0
        %919 = vmatprep.subr.bf16.mxu0 0
        %920 = vmatpush1.bf16.msra.mxu0 0
        %921 = vmatprep.subr.bf16.mxu0 0
        %922 = vmatpush1.bf16.msra.mxu0 0
        %923 = vmatprep.subr.bf16.mxu0 0
        %924 = vmatpush1.bf16.msra.mxu0 0
        %925 = vmatprep.subr.bf16.mxu0 0
        %926 = vmatpush1.bf16.msra.mxu0 0
        %927 = vmatprep.subr.bf16.mxu0 0
        %928 = vmatpush1.bf16.msra.mxu0 0
        %929 = vmatprep.subr.bf16.mxu0 0
        %930 = vmatpush1.bf16.msra.mxu0 0
        %931 = vmatprep.subr.bf16.mxu0 0
        %932 = vmatpush1.bf16.msra.mxu0 0
        %933 = vmatprep.subr.bf16.mxu0 0
        %934 = vmatpush1.bf16.msra.mxu0 0
        %935 = vmatprep.mubr.bf16.mxu0 0
        %936 = vmatmul.mubr.bf16.gmra.mrb[0].mxu0 %v898
        %v937 = vpop.f32.mrb[0].mxu0
        %v938 = vadd.f32 0.0, %v937
        %v939 = vpop.f32.mrb[0].mxu0
        %v940 = vpop.f32.mrb[0].mxu0
        %v941 = vpop.f32.mrb[0].mxu0
        %942 = vdwg.mxu0
        %944 = vrot.lane.b32.xlu0 %v938, 16
        %v945 = vpop.permute.xlu0 %944
        %vm947 = vcmask 195712
        %948 = vst.msk [vmem:[#allocation4] sm:$0xff] %vm947, %v945
        %v949 = vld [vmem:[#allocation2] sm:$0xf]
        %v950 = vld [vmem:[#allocation3] sm:$0xf]
        %951 = vrot.lane.b32.xlu0 %v585, 104
        %v952 = vpop.permute.xlu0 %951
        %v954 = vunpack.c.l.b16 %v949
        %v955 = vpack.c.b16 %v954, %v954
        %956 = vrot.lane.b32.xlu0 %v955, 104
        %v957 = vpop.permute.xlu0 %956
        %v959 = vsel %vm588, %v952, 0
        %v962 = vsel %vm588, %v957, 0
        %964 = vmatprep.subr.bf16.mxu0 0
        %965 = vmatpush1.bf16.xpose.msra.mxu0 %v962
        %966 = vmatprep.subr.bf16.mxu0 0
        %967 = vmatpush1.bf16.xpose.msra.mxu0 0
        %968 = vmatprep.subr.bf16.mxu0 0
        %969 = vmatpush1.bf16.xpose.msra.mxu0 0
        %970 = vmatprep.subr.bf16.mxu0 0
        %971 = vmatpush1.bf16.xpose.msra.mxu0 0
        %972 = vmatprep.subr.bf16.mxu0 0
        %973 = vmatpush1.bf16.xpose.msra.mxu0 0
        %974 = vmatprep.subr.bf16.mxu0 0
        %975 = vmatpush1.bf16.xpose.msra.mxu0 0
        %976 = vmatprep.subr.bf16.mxu0 0
        %977 = vmatpush1.bf16.xpose.msra.mxu0 0
        %978 = vmatprep.subr.bf16.mxu0 0
        %979 = vmatpush1.bf16.xpose.msra.mxu0 0
        %980 = vmatprep.subr.bf16.mxu0 0
        %981 = vmatpush1.bf16.xpose.msra.mxu0 0
        %982 = vmatprep.subr.bf16.mxu0 0
        %983 = vmatpush1.bf16.xpose.msra.mxu0 0
        %984 = vmatprep.subr.bf16.mxu0 0
        %985 = vmatpush1.bf16.xpose.msra.mxu0 0
        %986 = vmatprep.subr.bf16.mxu0 0
        %987 = vmatpush1.bf16.xpose.msra.mxu0 0
        %988 = vmatprep.subr.bf16.mxu0 0
        %989 = vmatpush1.bf16.xpose.msra.mxu0 0
        %990 = vmatprep.subr.bf16.mxu0 0
        %991 = vmatpush1.bf16.xpose.msra.mxu0 0
        %992 = vmatprep.subr.bf16.mxu0 0
        %993 = vmatpush1.bf16.xpose.msra.mxu0 0
        %994 = vmatprep.subr.bf16.mxu0 0
        %995 = vmatpush1.bf16.xpose.msra.mxu0 0
        %996 = vmatprep.mubr.bf16.mxu0 0
        %997 = vmatmul.mubr.bf16.gmra.mrb[0].mxu0 %v959
        %v998 = vpop.f32.mrb[0].mxu0
        %v999 = vadd.f32 0.0, %v998
        %v1000 = vpop.f32.mrb[0].mxu0
        %v1001 = vpop.f32.mrb[0].mxu0
        %v1002 = vpop.f32.mrb[0].mxu0
        %1003 = vdwg.mxu0
        %v1004 = vsel %vm588, %v999, -inf
        %1005 = vmax.xlane.f32.xlu0 %v1004
        %v1006 = vpop.xlane.xlu0 %1005
        %v1007 = vsub.f32 %v999, %v1006
        %v1008 = vmul.f32 %v1007, 1.442695
        %v1009 = vpow.pop %v1008
        %v1010 = vsel %vm588, %v1009, 0.0
        %1011 = vadd.xlane.f32.xlu0 %v1010
        %v1012 = vpop.xlane.xlu0 %1011
        %v1013 = vrcp.pop %v1012
        %v1014 = vmul.f32 %v1009, %v1013
        %s1015 = scalar_lea.vmem %s428, 24 [#allocation18]
        %1016 = vst.msk [vmem:[%s1015] sm:$0xff] %vm588, %v1014
        %v1017 = vpack.c.bf16 %v1014, %v1014
        %v1019 = vunpack.c.l.b16 %v950
        %v1020 = vpack.c.b16 %v1019, %v1019
        %1021 = vrot.lane.b32.xlu0 %v1020, 104
        %v1022 = vpop.permute.xlu0 %1021
        %v1024 = vsel %vm588, %v1017, 0
        %v1027 = vsel %vm651, %v1022, 0
        %1029 = vmatprep.subr.bf16.mxu0 0
        %1030 = vmatpush1.bf16.msra.mxu0 %v1027
        %1031 = vmatprep.subr.bf16.mxu0 0
        %1032 = vmatpush1.bf16.msra.mxu0 0
        %1033 = vmatprep.subr.bf16.mxu0 0
        %1034 = vmatpush1.bf16.msra.mxu0 0
        %1035 = vmatprep.subr.bf16.mxu0 0
        %1036 = vmatpush1.bf16.msra.mxu0 0
        %1037 = vmatprep.subr.bf16.mxu0 0
        %1038 = vmatpush1.bf16.msra.mxu0 0
        %1039 = vmatprep.subr.bf16.mxu0 0
        %1040 = vmatpush1.bf16.msra.mxu0 0
        %1041 = vmatprep.subr.bf16.mxu0 0
        %1042 = vmatpush1.bf16.msra.mxu0 0
        %1043 = vmatprep.subr.bf16.mxu0 0
        %1044 = vmatpush1.bf16.msra.mxu0 0
        %1045 = vmatprep.subr.bf16.mxu0 0
        %1046 = vmatpush1.bf16.msra.mxu0 0
        %1047 = vmatprep.subr.bf16.mxu0 0
        %1048 = vmatpush1.bf16.msra.mxu0 0
        %1049 = vmatprep.subr.bf16.mxu0 0
        %1050 = vmatpush1.bf16.msra.mxu0 0
        %1051 = vmatprep.subr.bf16.mxu0 0
        %1052 = vmatpush1.bf16.msra.mxu0 0
        %1053 = vmatprep.subr.bf16.mxu0 0
        %1054 = vmatpush1.bf16.msra.mxu0 0
        %1055 = vmatprep.subr.bf16.mxu0 0
        %1056 = vmatpush1.bf16.msra.mxu0 0
        %1057 = vmatprep.subr.bf16.mxu0 0
        %1058 = vmatpush1.bf16.msra.mxu0 0
        %1059 = vmatprep.subr.bf16.mxu0 0
        %1060 = vmatpush1.bf16.msra.mxu0 0
        %1061 = vmatprep.mubr.bf16.mxu0 0
        %1062 = vmatmul.mubr.bf16.gmra.mrb[0].mxu0 %v1024
        %v1063 = vpop.f32.mrb[0].mxu0
        %v1064 = vadd.f32 0.0, %v1063
        %v1065 = vpop.f32.mrb[0].mxu0
        %v1066 = vpop.f32.mrb[0].mxu0
        %v1067 = vpop.f32.mrb[0].mxu0
        %1068 = vdwg.mxu0
        %1070 = vrot.lane.b32.xlu0 %v1064, 24
        %v1071 = vpop.permute.xlu0 %1070
        %vm1073 = vcmask 261312
        %1074 = vst.msk [vmem:[#allocation4] sm:$0xff] %vm1073, %v1071
        %v1075 = vld [vmem:[#allocation4] sm:$0xff]
        %v1076 = vpack.c.bf16 %v1075, %v1075
        %v1077 = vld [vmem:[#allocation14] sm:$0xf]
        %v1078 = vld [vmem:[#allocation14 + $0x4] sm:$0xf]
        %v1079 = vld [vmem:[#allocation14 + $0x8] sm:$0xf]
        %v1080 = vld [vmem:[#allocation14 + $0xc] sm:$0xf]
        %v1081 = vld [vmem:[#allocation16] sm:$0x1]
        %v1083 = vlaneseq
        %v1084 = vshrl.u32 %v1083, 7
        %v1085 = vsub.s32 0, %v1084
        %v1086 = vrot.slane %v1081, %v1085
        %v1092 = vunpack.c.l.b16 %v1077
        %v1093 = vunpack.c.l.b16 %v1078
        %v1094 = vunpack.c.l.b16 %v1079
        %v1095 = vunpack.c.l.b16 %v1080
        %v1096 = vpack.c.b16 %v1093, %v1092
        %v1097 = vpack.c.b16 %v1095, %v1094
        %v1101 = vsel %vm540, %v1076, 0
        %1103 = vmatprep.subr.bf16.mxu0 0
        %1104 = vmatpush1.bf16.msra.mxu0 %v1096
        %1105 = vmatprep.subr.bf16.mxu0 0
        %1106 = vmatpush1.bf16.msra.mxu0 %v1097
        %1107 = vmatprep.subr.bf16.mxu0 0
        %1108 = vmatpush1.bf16.msra.mxu0 0
        %1109 = vmatprep.subr.bf16.mxu0 0
        %1110 = vmatpush1.bf16.msra.mxu0 0
        %1111 = vmatprep.subr.bf16.mxu0 0
        %1112 = vmatpush1.bf16.msra.mxu0 0
        %1113 = vmatprep.subr.bf16.mxu0 0
        %1114 = vmatpush1.bf16.msra.mxu0 0
        %1115 = vmatprep.subr.bf16.mxu0 0
        %1116 = vmatpush1.bf16.msra.mxu0 0
        %1117 = vmatprep.subr.bf16.mxu0 0
        %1118 = vmatpush1.bf16.msra.mxu0 0
        %1119 = vmatprep.subr.bf16.mxu0 0
        %1120 = vmatpush1.bf16.msra.mxu0 0
        %1121 = vmatprep.subr.bf16.mxu0 0
        %1122 = vmatpush1.bf16.msra.mxu0 0
        %1123 = vmatprep.subr.bf16.mxu0 0
        %1124 = vmatpush1.bf16.msra.mxu0 0
        %1125 = vmatprep.subr.bf16.mxu0 0
        %1126 = vmatpush1.bf16.msra.mxu0 0
        %1127 = vmatprep.subr.bf16.mxu0 0
        %1128 = vmatpush1.bf16.msra.mxu0 0
        %1129 = vmatprep.subr.bf16.mxu0 0
        %1130 = vmatpush1.bf16.msra.mxu0 0
        %1131 = vmatprep.subr.bf16.mxu0 0
        %1132 = vmatpush1.bf16.msra.mxu0 0
        %1133 = vmatprep.subr.bf16.mxu0 0
        %1134 = vmatpush1.bf16.msra.mxu0 0
        %1135 = vmatprep.mubr.bf16.mxu0 0
        %1136 = vmatmul.mubr.bf16.gmra.mrb[0].mxu0 %v1101
        %v1137 = vpop.f32.mrb[0].mxu0
        %v1138 = vadd.f32 %v1086, %v1137
        %v1139 = vpop.f32.mrb[0].mxu0
        %v1140 = vpop.f32.mrb[0].mxu0
        %v1141 = vpop.f32.mrb[0].mxu0
        %1142 = vdwg.mxu0
        %1143 = vst.msk [vmem:[%s421] sm:$0xff] %vm540, %v1138
        %s1144 = sand.u32 %s206, 1
        %s1145 = scalar_lea.sflag [#allocation7], %s1144
        %s1146 = sand.u32 %s206, 1
        %s1147 = smul.addr %s1146, 8
        %s1148 = scalar_lea.vmem [#allocation17], %s1147
        %s1149 = sand.u32 %s234, 1
        %s1150 = scalar_lea.sflag [#allocation19], %s1149
        %s1151 = sand.u32 %s234, 1
        %s1152 = smul.addr %s1151, 32
        %s1153 = scalar_lea.vmem [#allocation18], %s1152
        // Predicated region
        $region81: #{tpu_custom_call.1} parent=47 // pred_check
          %p1154 = pneg %p216
        $region82: #{tpu_custom_call.1} parent=47 // pred_check_branch
          %1156 = sbr.rel (%p1154) target = $region84
        $region83: #{tpu_custom_call.1} parent=47 // pred_region
          %s1158 = ssub.s32 128, 128
          %1159 = vsyncadd %s1145, %s1158
          %s1160 = sadd.s32 %s37, %s36
          %s1161 = smul.addr %s1160, 128
          %s1162 = scalar_lea.hbm %s7, %s1161
          %s1164 = sshll.u32 %s1148, 4
          %s1165 = int_to_ptr.vmem [resolvable:$true] %s1164
          %1167 = dma.vmem_to_hbm [thread:$0]  %s1165, 128, %s1162, %s1145
        $region84: #{tpu_custom_call.1} parent=47 // pred_fallthru
          _
        // Predicated region
        $region85: #{tpu_custom_call.1} parent=47 // pred_check
          %p1168 = pneg %p244
        $region86: #{tpu_custom_call.1} parent=47 // pred_check_branch
          %1170 = sbr.rel (%p1168) target = $region88
        $region87: #{tpu_custom_call.1} parent=47 // pred_region
          %s1172 = ssub.s32 512, 512
          %1173 = vsyncadd %s1150, %s1172
          %s1174 = smul.addr %s36, 4
          %s1175 = sadd.s32 %s37, %s1174
          %s1176 = smul.addr %s1175, 128
          %s1177 = scalar_lea.hbm %s8, %s1176
          %s1178 = sshll.u32 %s1153, 4
          %s1179 = int_to_ptr.vmem [resolvable:$true] %s1178
          %1184 = dma.vmem_to_hbm [thread:$0]  %s1179, 512, %s1177, %s1150, 128, 128, 8
        $region88: #{tpu_custom_call.1} parent=47 // pred_fallthru
          _
      $region48: #{tpu_custom_call.1} parent=5 // pred_fallthru
        _
      %p1185 = scmp.le.s32.totalorder 2, %s27
      // Predicated region
      $region89: #{tpu_custom_call.1} parent=5 // pred_check
        %p1186 = pneg %p1185
      $region90: #{tpu_custom_call.1} parent=5 // pred_check_branch
        %1188 = sbr.rel (%p1186) target = $region92
      $region91: #{tpu_custom_call.1} parent=5 // pred_region
        %s1189 = ssub.s32 %s27, 2
        // Predicated region
        $region93: #{tpu_custom_call.1} parent=91 // pred_check
          %p1190 = pneg %p222
        $region94: #{tpu_custom_call.1} parent=91 // pred_check_branch
          %1192 = sbr.rel (%p1190) target = $region96
        $region95: #{tpu_custom_call.1} parent=91 // pred_region
          %s1193 = sand.u32 %s207, 1
          %s1194 = scalar_lea.sflag [#allocation7], %s1193
          %s1195 = sand.u32 %s207, 1
          %s1196 = smul.addr %s1195, 8
          %s1197 = scalar_lea.vmem [#allocation17], %s1196
          %1198 = dma.done %s1194, 128
        $region96: #{tpu_custom_call.1} parent=91 // pred_fallthru
          _
        // Predicated region
        $region97: #{tpu_custom_call.1} parent=91 // pred_check
          %p1199 = pneg %p250
        $region98: #{tpu_custom_call.1} parent=91 // pred_check_branch
          %1201 = sbr.rel (%p1199) target = $region100
        $region99: #{tpu_custom_call.1} parent=91 // pred_region
          %s1202 = sand.u32 %s235, 1
          %s1203 = scalar_lea.sflag [#allocation19], %s1202
          %s1204 = sand.u32 %s235, 1
          %s1205 = smul.addr %s1204, 32
          %s1206 = scalar_lea.vmem [#allocation18], %s1205
          %1207 = dma.done %s1203, 512
        $region100: #{tpu_custom_call.1} parent=91 // pred_fallthru
          _
      $region92: #{tpu_custom_call.1} parent=5 // pred_fallthru
        _
    $region6: #{tpu_custom_call.1} parent=1 // loop_footer
      %s31 = sadd.s32 1, %s27
    $region7: #{tpu_custom_call.1} parent=1 // loop_footer_branch
      %26 = sbr.rel target = $region3
    $region8: #{tpu_custom_call.1} parent=1 // loop_exit
      _
    %1208 = vsyncpa [#allocation6], 1
    %s1209 = scalar_lea.sflag [#allocation6], 1
    %1210 = vsyncpa %s1209, 1
    %1211 = vsyncpa [#allocation9], 1
    %1212 = vsyncpa [#allocation12], 1
    %1213 = vsyncpa [#allocation15], 1
    %1214 = vsyncpa [#allocation7], 1
    %s1215 = scalar_lea.sflag [#allocation7], 1
    %1216 = vsyncpa %s1215, 1
    %1217 = vsyncpa [#allocation19], 1
    %s1218 = scalar_lea.sflag [#allocation19], 1
    %1219 = vsyncpa %s1218, 1

</llo_original>
